<compile_context>
chip_gen: v6e
topology: v6e:2x2x1
jax: 0.10.0
libtpu: 0.0.40
codegen_flags: <defaults>
</compile_context>

<pallas_src>
import functools

import jax
import jax.numpy as jnp
from jax import lax
from jax.experimental import pallas as pl
from jax.experimental.pallas import tpu as pltpu

KH = KW = 4
STRIDE = 2
LEAKY_SLOPE = 0.01  # PyTorch nn.LeakyReLU default negative_slope


def _round_up(v, m):
    return ((v + m - 1) // m) * m


def _fused_conv_kernel(xa_ref, xb_ref, w_ref, b_ref, o_ref, *, tr, wo, apply_act):
    """One grid step = `tr` output rows of one batch element.

    xa_ref: (1, tr, C4, Ws)   space-to-depth rows [i*tr, i*tr+tr)
    xb_ref: (1, 1,  C4, Ws)   row i*tr+tr (bottom halo, same HBM array as xa)
    w_ref : (Cout, Ktot)      resident weights, columns ordered (sh, sw, ci, ph, pw)
    b_ref : (Cout, 1)         resident f32 bias
    o_ref : (1, tr, Cout, Wo) output rows (lane dim = Wo)
    """
    for j in range(tr):  # static unroll -> all indices static
        s0 = xa_ref[0, j]                                          # (C4, Ws)
        s1 = xa_ref[0, j + 1] if j + 1 < tr else xb_ref[0, 0]      # (C4, Ws)
        # The four taps of the equivalent 2x2/stride-1 conv; row order (sh, sw, ci, ph, pw)
        # matches the rearranged weight columns.
        p = jnp.concatenate(
            [s0[:, 0:wo], s0[:, 1:1 + wo], s1[:, 0:wo], s1[:, 1:1 + wo]], axis=0)
        acc = jnp.dot(w_ref[...], p, preferred_element_type=jnp.float32) + b_ref[...]
        if apply_act:
            acc = jnp.where(acc >= 0, acc, LEAKY_SLOPE * acc)
        o_ref[0, j] = acc.astype(o_ref.dtype)


def conv_block_forward(x, weight, bias, *, act="relu", padding=1,
                       compute_dtype=None, nchw_output=True):
    """x: (N, Cin, H, W); weight: (Cout, Cin, 4, 4); bias: (Cout,).

    Returns NCHW (N, Cout, Ho, Wo) if nchw_output else the kernel-native
    (N, Ho, Cout, Wo) layout (useful when chaining conv_blocks).
    """
    assert act.lower() in ("relu", "none")
    N, Cin, H, W = x.shape
    Cout = weight.shape[0]
    assert weight.shape == (Cout, Cin, KH, KW)

    pad = padding
    Ho = (H + 2 * pad - KH) // STRIDE + 1
    Wo = (W + 2 * pad - KW) // STRIDE + 1
    assert Ho >= 1 and Wo >= 1

    out_dtype = x.dtype
    cdt = jnp.dtype(out_dtype if compute_dtype is None else compute_dtype)
    cb = cdt.itemsize
    ob = jnp.dtype(out_dtype).itemsize

    # ---- glue (one pass over the input): pad + 2x2 space-to-depth, channel-major ----
    # xp[n, ci, 2ho+kh, 2wo+kw] feeds output (ho, wo); folding the (kh%2, kw%2) parities
    # into channels makes all taps unit-offset contiguous slices -> no patch matrix.
    Hp, Wp = H + 2 * pad, W + 2 * pad
    eh, ew = Hp % 2, Wp % 2                    # extra zero row/col so Hp, Wp are even
    xp = jnp.pad(x, ((0, 0), (0, 0), (pad, pad + eh), (pad, pad + ew)))
    Hs, Ws = (Hp + eh) // 2, (Wp + ew) // 2    # Hs >= Ho + 1, Ws >= Wo + 1
    C4 = Cin * 4
    xsd = (xp.reshape(N, Cin, Hs, 2, Ws, 2)
             .transpose(0, 2, 1, 3, 5, 4)      # (N, Hs, Cin, ph, pw, Ws)
             .reshape(N, Hs, C4, Ws)
             .astype(cdt))

    # Weight columns reordered to (sh, sw, ci, ph, pw) to match the in-kernel concat.
    Ktot = Cin * KH * KW
    w_re = (weight.reshape(Cout, Cin, 2, 2, 2, 2)   # (co, ci, sh, ph, sw, pw)
                  .transpose(0, 2, 4, 1, 3, 5)
                  .reshape(Cout, Ktot)
                  .astype(cdt))
    b2 = bias.reshape(Cout, 1).astype(jnp.float32)

    # ---- rows per grid step: divisor of Ho, modest VMEM block, >=2 total steps ----
    lane = 128
    in_sub = 8 if cb == 4 else 16
    out_sub = 8 if ob == 4 else 16
    row_bytes = _round_up(C4, in_sub) * _round_up(Ws, lane) * cb
    out_row_bytes = _round_up(Cout, out_sub) * _round_up(Wo, lane) * ob
    tr = 1
    for cand in range(1, min(Ho, 16) + 1):
        if Ho % cand:
            continue
        if cand * (row_bytes + out_row_bytes) > (4 << 20):
            continue                          # keep double-buffered blocks small
        if N * (Ho // cand) < 2 and Ho > 1:
            continue                          # keep >=2 steps for v7x's two TensorCores
        tr = cand
    nblk = Ho // tr

    # ---- generation-aware VMEM request (streamed blocks x2 buffers + residents) ----
    w_bytes = (_round_up(Cout, in_sub) * _round_up(Ktot, lane) * cb
               + _round_up(Cout, 8) * lane * 4)
    est = 2 * (tr * row_bytes + row_bytes + tr * out_row_bytes) + 2 * w_bytes
    try:
        cap = int(getattr(pltpu.get_tpu_info(), "vmem_capacity_bytes", 64 << 20))
    except Exception:
        cap = 64 << 20
    vmem_limit = int(min(max(2 * est, 16 << 20), int(cap * 0.7)))

    kernel = functools.partial(_fused_conv_kernel, tr=tr, wo=Wo,
                               apply_act=(act.lower() == "relu"))
    out = pl.pallas_call(
        kernel,
        out_shape=jax.ShapeDtypeStruct((N, Ho, Cout, Wo), out_dtype),
        grid_spec=pltpu.PrefetchScalarGridSpec(
            num_scalar_prefetch=0,
            grid=(N, nblk),
            in_specs=[
                pl.BlockSpec((1, tr, C4, Ws), lambda n, i: (n, i, 0, 0)),
                pl.BlockSpec((1, 1, C4, Ws), lambda n, i: (n, (i + 1) * tr, 0, 0)),
                pl.BlockSpec((Cout, Ktot), lambda n, i: (0, 0)),   # resident weights
                pl.BlockSpec((Cout, 1), lambda n, i: (0, 0)),      # resident bias
            ],
            out_specs=pl.BlockSpec((1, tr, Cout, Wo), lambda n, i: (n, i, 0, 0)),
        ),
        compiler_params=pltpu.CompilerParams(
            dimension_semantics=("parallel", "parallel"),
            vmem_limit_bytes=vmem_limit,
        ),
    )(xsd, xsd, w_re, b2)

    if nchw_output:
        out = out.transpose(0, 2, 1, 3)        # (N, Cout, Ho, Wo)
    return out


def _reference(x, weight, bias, act="relu", padding=1):
    y = lax.conv_general_dilated(
        x, weight, window_strides=(STRIDE, STRIDE),
        padding=((padding, padding), (padding, padding)),
        dimension_numbers=("NCHW", "OIHW", "NCHW"),
    ) + bias[None, :, None, None]
    if act == "relu":
        y = jnp.where(y >= 0, y, LEAKY_SLOPE * y)
    return y


if __name__ == "__main__":
    N, Cin, H, W = 2, 4, 16, 16
    Cout = 8

    key = jax.random.PRNGKey(0)
    kx, kw, kb = jax.random.split(key, 3)
    x = jax.random.normal(kx, (N, Cin, H, W), dtype=jnp.float32)
    fan_in = Cin * KH * KW
    weight = jax.random.normal(kw, (Cout, Cin, KH, KW), dtype=jnp.float32) / jnp.sqrt(fan_in)
    bias = jax.random.normal(kb, (Cout,), dtype=jnp.float32) * 0.1

    # f32 path, LeakyReLU
    y = jax.block_until_ready(conv_block_forward(x, weight, bias, act="relu", padding=1))
    assert y.shape == (N, Cout, H // 2, W // 2), y.shape
    y_ref = _reference(x, weight, bias, "relu", 1)
    assert jnp.allclose(y, y_ref, rtol=1e-4, atol=1e-4), float(jnp.max(jnp.abs(y - y_ref)))

    # f32 path, act='none'
    y2 = jax.block_until_ready(conv_block_forward(x, weight, bias, act="none", padding=1))
    assert jnp.allclose(y2, _reference(x, weight, bias, "none", 1), rtol=1e-4, atol=1e-4)

    # bf16 streamed operands (halves HBM bytes), f32 accumulate / epilogue
    yb = jax.block_until_ready(
        conv_block_forward(x, weight, bias, act="relu", padding=1,
                           compute_dtype=jnp.bfloat16))
    assert jnp.allclose(yb, y_ref, rtol=2e-2, atol=2e-2)

    # odd spatial size exercises the even-pad path
    xo = jax.random.normal(kx, (N, Cin, 15, 15), dtype=jnp.float32)
    yo = jax.block_until_ready(conv_block_forward(xo, weight, bias, act="relu", padding=1))
    assert jnp.allclose(yo, _reference(xo, weight, bias, "relu", 1), rtol=1e-4, atol=1e-4)

    print("KERNEL_OK")
</pallas_src>

<mosaic_0001>
module attributes {stable_mosaic.version = 11 : i64} {
  func.func @_fused_conv_kernel(%arg0: i32, %arg1: i32, %arg2: memref<1x8x16x9xf32, #tpu.memory_space<vmem>>, %arg3: memref<1x1x16x9xf32, #tpu.memory_space<vmem>>, %arg4: memref<8x64xf32, #tpu.memory_space<vmem>>, %arg5: memref<8x1xf32, #tpu.memory_space<vmem>>, %arg6: memref<1x8x8x8xf32, #tpu.memory_space<vmem>>) attributes {dimension_semantics = [#tpu.dimension_semantics<parallel>, #tpu.dimension_semantics<parallel>], iteration_bounds = array<i64: 2, 1>, scalar_prefetch = 0 : i64, scratch_operands = 0 : i64, tpu.core_type = #tpu.core_type<tc>, window_params = [{transform_indices = @transform_0, window_bounds = array<i64: 1, 8, 16, 9>}, {transform_indices = @transform_1, window_bounds = array<i64: 1, 1, 16, 9>}, {pipeline_mode = #tpu.pipeline_mode<synchronous>, transform_indices = @transform_2, window_bounds = array<i64: 8, 64>}, {pipeline_mode = #tpu.pipeline_mode<synchronous>, transform_indices = @transform_3, window_bounds = array<i64: 8, 1>}, {transform_indices = @transform_4, window_bounds = array<i64: 1, 8, 8, 8>}]} {
    %c0 = arith.constant 0 : index
    %c0_0 = arith.constant 0 : index
    %c0_1 = arith.constant 0 : index
    %c0_2 = arith.constant 0 : index
    %0 = vector.load %arg2[%c0, %c0_0, %c0_1, %c0_2] : memref<1x8x16x9xf32, #tpu.memory_space<vmem>>, vector<1x1x16x9xf32>
    %1 = vector.shape_cast %0 : vector<1x1x16x9xf32> to vector<16x9xf32>
    %c0_3 = arith.constant 0 : index
    %c1 = arith.constant 1 : index
    %c0_4 = arith.constant 0 : index
    %c0_5 = arith.constant 0 : index
    %2 = vector.load %arg2[%c0_3, %c1, %c0_4, %c0_5] : memref<1x8x16x9xf32, #tpu.memory_space<vmem>>, vector<1x1x16x9xf32>
    %3 = vector.shape_cast %2 : vector<1x1x16x9xf32> to vector<16x9xf32>
    %4 = vector.extract_strided_slice %1 {offsets = [0, 0], sizes = [16, 8], strides = [1, 1]} : vector<16x9xf32> to vector<16x8xf32>
    %5 = vector.extract_strided_slice %1 {offsets = [0, 1], sizes = [16, 8], strides = [1, 1]} : vector<16x9xf32> to vector<16x8xf32>
    %6 = vector.extract_strided_slice %3 {offsets = [0, 0], sizes = [16, 8], strides = [1, 1]} : vector<16x9xf32> to vector<16x8xf32>
    %7 = vector.extract_strided_slice %3 {offsets = [0, 1], sizes = [16, 8], strides = [1, 1]} : vector<16x9xf32> to vector<16x8xf32>
    %8 = tpu.concatenate %4, %5, %6, %7 in 0 : vector<16x8xf32>, vector<16x8xf32>, vector<16x8xf32>, vector<16x8xf32> -> vector<64x8xf32>
    %c0_6 = arith.constant 0 : index
    %c0_7 = arith.constant 0 : index
    %9 = vector.load %arg4[%c0_6, %c0_7] : memref<8x64xf32, #tpu.memory_space<vmem>>, vector<8x64xf32>
    %cst = arith.constant dense<0.000000e+00> : vector<8x8xf32>
    %10 = tpu.matmul %9, %8, %cst {dimension_numbers = #tpu.dot_dimension_numbers<[1], [0], [0], [1], [0, 0, 1, 1], [], []>} : vector<8x64xf32>, vector<64x8xf32>, vector<8x8xf32> -> vector<8x8xf32>
    %c0_8 = arith.constant 0 : index
    %c0_9 = arith.constant 0 : index
    %11 = vector.load %arg5[%c0_8, %c0_9] : memref<8x1xf32, #tpu.memory_space<vmem>>, vector<8x1xf32>
    %12 = vector.broadcast %11 : vector<8x1xf32> to vector<8x8xf32>
    %13 = arith.addf %10, %12 : vector<8x8xf32>
    %cst_10 = arith.constant 0.000000e+00 : f32
    %14 = vector.broadcast %cst_10 : f32 to vector<8x8xf32>
    %15 = arith.cmpf oge, %13, %14 : vector<8x8xf32>
    %cst_11 = arith.constant 0.00999999977 : f32
    %16 = vector.broadcast %cst_11 : f32 to vector<8x8xf32>
    %17 = arith.mulf %16, %13 : vector<8x8xf32>
    %18 = arith.select %15, %13, %17 : vector<8x8xi1>, vector<8x8xf32>
    %c0_12 = arith.constant 0 : index
    %c0_13 = arith.constant 0 : index
    %c0_14 = arith.constant 0 : index
    %c0_15 = arith.constant 0 : index
    %19 = vector.load %arg6[%c0_12, %c0_13, %c0_14, %c0_15] : memref<1x8x8x8xf32, #tpu.memory_space<vmem>>, vector<1x1x8x8xf32>
    %20 = vector.shape_cast %19 : vector<1x1x8x8xf32> to vector<8x8xf32>
    %21 = vector.shape_cast %18 : vector<8x8xf32> to vector<1x1x8x8xf32>
    tpu.vector_store %arg6[%c0_12, %c0_13, %c0_14, %c0_15], %21 {strides = array<i32>} : memref<1x8x8x8xf32, #tpu.memory_space<vmem>>, vector<1x1x8x8xf32>,
    %c0_16 = arith.constant 0 : index
    %c1_17 = arith.constant 1 : index
    %c0_18 = arith.constant 0 : index
    %c0_19 = arith.constant 0 : index
    %22 = vector.load %arg2[%c0_16, %c1_17, %c0_18, %c0_19] : memref<1x8x16x9xf32, #tpu.memory_space<vmem>>, vector<1x1x16x9xf32>
    %23 = vector.shape_cast %22 : vector<1x1x16x9xf32> to vector<16x9xf32>
    %c0_20 = arith.constant 0 : index
    %c2 = arith.constant 2 : index
    %c0_21 = arith.constant 0 : index
    %c0_22 = arith.constant 0 : index
    %24 = vector.load %arg2[%c0_20, %c2, %c0_21, %c0_22] : memref<1x8x16x9xf32, #tpu.memory_space<vmem>>, vector<1x1x16x9xf32>
    %25 = vector.shape_cast %24 : vector<1x1x16x9xf32> to vector<16x9xf32>
    %26 = vector.extract_strided_slice %23 {offsets = [0, 0], sizes = [16, 8], strides = [1, 1]} : vector<16x9xf32> to vector<16x8xf32>
    %27 = vector.extract_strided_slice %23 {offsets = [0, 1], sizes = [16, 8], strides = [1, 1]} : vector<16x9xf32> to vector<16x8xf32>
    %28 = vector.extract_strided_slice %25 {offsets = [0, 0], sizes = [16, 8], strides = [1, 1]} : vector<16x9xf32> to vector<16x8xf32>
    %29 = vector.extract_strided_slice %25 {offsets = [0, 1], sizes = [16, 8], strides = [1, 1]} : vector<16x9xf32> to vector<16x8xf32>
    %30 = tpu.concatenate %26, %27, %28, %29 in 0 : vector<16x8xf32>, vector<16x8xf32>, vector<16x8xf32>, vector<16x8xf32> -> vector<64x8xf32>
    %c0_23 = arith.constant 0 : index
    %c0_24 = arith.constant 0 : index
    %31 = vector.load %arg4[%c0_23, %c0_24] : memref<8x64xf32, #tpu.memory_space<vmem>>, vector<8x64xf32>
    %cst_25 = arith.constant dense<0.000000e+00> : vector<8x8xf32>
    %32 = tpu.matmul %31, %30, %cst_25 {dimension_numbers = #tpu.dot_dimension_numbers<[1], [0], [0], [1], [0, 0, 1, 1], [], []>} : vector<8x64xf32>, vector<64x8xf32>, vector<8x8xf32> -> vector<8x8xf32>
    %c0_26 = arith.constant 0 : index
    %c0_27 = arith.constant 0 : index
    %33 = vector.load %arg5[%c0_26, %c0_27] : memref<8x1xf32, #tpu.memory_space<vmem>>, vector<8x1xf32>
    %34 = vector.broadcast %33 : vector<8x1xf32> to vector<8x8xf32>
    %35 = arith.addf %32, %34 : vector<8x8xf32>
    %cst_28 = arith.constant 0.000000e+00 : f32
    %36 = vector.broadcast %cst_28 : f32 to vector<8x8xf32>
    %37 = arith.cmpf oge, %35, %36 : vector<8x8xf32>
    %cst_29 = arith.constant 0.00999999977 : f32
    %38 = vector.broadcast %cst_29 : f32 to vector<8x8xf32>
    %39 = arith.mulf %38, %35 : vector<8x8xf32>
    %40 = arith.select %37, %35, %39 : vector<8x8xi1>, vector<8x8xf32>
    %c0_30 = arith.constant 0 : index
    %c1_31 = arith.constant 1 : index
    %c0_32 = arith.constant 0 : index
    %c0_33 = arith.constant 0 : index
    %41 = vector.load %arg6[%c0_30, %c1_31, %c0_32, %c0_33] : memref<1x8x8x8xf32, #tpu.memory_space<vmem>>, vector<1x1x8x8xf32>
    %42 = vector.shape_cast %41 : vector<1x1x8x8xf32> to vector<8x8xf32>
    %43 = vector.shape_cast %40 : vector<8x8xf32> to vector<1x1x8x8xf32>
    tpu.vector_store %arg6[%c0_30, %c1_31, %c0_32, %c0_33], %43 {strides = array<i32>} : memref<1x8x8x8xf32, #tpu.memory_space<vmem>>, vector<1x1x8x8xf32>,
    %c0_34 = arith.constant 0 : index
    %c2_35 = arith.constant 2 : index
    %c0_36 = arith.constant 0 : index
    %c0_37 = arith.constant 0 : index
    %44 = vector.load %arg2[%c0_34, %c2_35, %c0_36, %c0_37] : memref<1x8x16x9xf32, #tpu.memory_space<vmem>>, vector<1x1x16x9xf32>
    %45 = vector.shape_cast %44 : vector<1x1x16x9xf32> to vector<16x9xf32>
    %c0_38 = arith.constant 0 : index
    %c3 = arith.constant 3 : index
    %c0_39 = arith.constant 0 : index
    %c0_40 = arith.constant 0 : index
    %46 = vector.load %arg2[%c0_38, %c3, %c0_39, %c0_40] : memref<1x8x16x9xf32, #tpu.memory_space<vmem>>, vector<1x1x16x9xf32>
    %47 = vector.shape_cast %46 : vector<1x1x16x9xf32> to vector<16x9xf32>
    %48 = vector.extract_strided_slice %45 {offsets = [0, 0], sizes = [16, 8], strides = [1, 1]} : vector<16x9xf32> to vector<16x8xf32>
    %49 = vector.extract_strided_slice %45 {offsets = [0, 1], sizes = [16, 8], strides = [1, 1]} : vector<16x9xf32> to vector<16x8xf32>
    %50 = vector.extract_strided_slice %47 {offsets = [0, 0], sizes = [16, 8], strides = [1, 1]} : vector<16x9xf32> to vector<16x8xf32>
    %51 = vector.extract_strided_slice %47 {offsets = [0, 1], sizes = [16, 8], strides = [1, 1]} : vector<16x9xf32> to vector<16x8xf32>
    %52 = tpu.concatenate %48, %49, %50, %51 in 0 : vector<16x8xf32>, vector<16x8xf32>, vector<16x8xf32>, vector<16x8xf32> -> vector<64x8xf32>
    %c0_41 = arith.constant 0 : index
    %c0_42 = arith.constant 0 : index
    %53 = vector.load %arg4[%c0_41, %c0_42] : memref<8x64xf32, #tpu.memory_space<vmem>>, vector<8x64xf32>
    %cst_43 = arith.constant dense<0.000000e+00> : vector<8x8xf32>
    %54 = tpu.matmul %53, %52, %cst_43 {dimension_numbers = #tpu.dot_dimension_numbers<[1], [0], [0], [1], [0, 0, 1, 1], [], []>} : vector<8x64xf32>, vector<64x8xf32>, vector<8x8xf32> -> vector<8x8xf32>
    %c0_44 = arith.constant 0 : index
    %c0_45 = arith.constant 0 : index
    %55 = vector.load %arg5[%c0_44, %c0_45] : memref<8x1xf32, #tpu.memory_space<vmem>>, vector<8x1xf32>
    %56 = vector.broadcast %55 : vector<8x1xf32> to vector<8x8xf32>
    %57 = arith.addf %54, %56 : vector<8x8xf32>
    %cst_46 = arith.constant 0.000000e+00 : f32
    %58 = vector.broadcast %cst_46 : f32 to vector<8x8xf32>
    %59 = arith.cmpf oge, %57, %58 : vector<8x8xf32>
    %cst_47 = arith.constant 0.00999999977 : f32
    %60 = vector.broadcast %cst_47 : f32 to vector<8x8xf32>
    %61 = arith.mulf %60, %57 : vector<8x8xf32>
    %62 = arith.select %59, %57, %61 : vector<8x8xi1>, vector<8x8xf32>
    %c0_48 = arith.constant 0 : index
    %c2_49 = arith.constant 2 : index
    %c0_50 = arith.constant 0 : index
    %c0_51 = arith.constant 0 : index
    %63 = vector.load %arg6[%c0_48, %c2_49, %c0_50, %c0_51] : memref<1x8x8x8xf32, #tpu.memory_space<vmem>>, vector<1x1x8x8xf32>
    %64 = vector.shape_cast %63 : vector<1x1x8x8xf32> to vector<8x8xf32>
    %65 = vector.shape_cast %62 : vector<8x8xf32> to vector<1x1x8x8xf32>
    tpu.vector_store %arg6[%c0_48, %c2_49, %c0_50, %c0_51], %65 {strides = array<i32>} : memref<1x8x8x8xf32, #tpu.memory_space<vmem>>, vector<1x1x8x8xf32>,
    %c0_52 = arith.constant 0 : index
    %c3_53 = arith.constant 3 : index
    %c0_54 = arith.constant 0 : index
    %c0_55 = arith.constant 0 : index
    %66 = vector.load %arg2[%c0_52, %c3_53, %c0_54, %c0_55] : memref<1x8x16x9xf32, #tpu.memory_space<vmem>>, vector<1x1x16x9xf32>
    %67 = vector.shape_cast %66 : vector<1x1x16x9xf32> to vector<16x9xf32>
    %c0_56 = arith.constant 0 : index
    %c4 = arith.constant 4 : index
    %c0_57 = arith.constant 0 : index
    %c0_58 = arith.constant 0 : index
    %68 = vector.load %arg2[%c0_56, %c4, %c0_57, %c0_58] : memref<1x8x16x9xf32, #tpu.memory_space<vmem>>, vector<1x1x16x9xf32>
    %69 = vector.shape_cast %68 : vector<1x1x16x9xf32> to vector<16x9xf32>
    %70 = vector.extract_strided_slice %67 {offsets = [0, 0], sizes = [16, 8], strides = [1, 1]} : vector<16x9xf32> to vector<16x8xf32>
    %71 = vector.extract_strided_slice %67 {offsets = [0, 1], sizes = [16, 8], strides = [1, 1]} : vector<16x9xf32> to vector<16x8xf32>
    %72 = vector.extract_strided_slice %69 {offsets = [0, 0], sizes = [16, 8], strides = [1, 1]} : vector<16x9xf32> to vector<16x8xf32>
    %73 = vector.extract_strided_slice %69 {offsets = [0, 1], sizes = [16, 8], strides = [1, 1]} : vector<16x9xf32> to vector<16x8xf32>
    %74 = tpu.concatenate %70, %71, %72, %73 in 0 : vector<16x8xf32>, vector<16x8xf32>, vector<16x8xf32>, vector<16x8xf32> -> vector<64x8xf32>
    %c0_59 = arith.constant 0 : index
    %c0_60 = arith.constant 0 : index
    %75 = vector.load %arg4[%c0_59, %c0_60] : memref<8x64xf32, #tpu.memory_space<vmem>>, vector<8x64xf32>
    %cst_61 = arith.constant dense<0.000000e+00> : vector<8x8xf32>
    %76 = tpu.matmul %75, %74, %cst_61 {dimension_numbers = #tpu.dot_dimension_numbers<[1], [0], [0], [1], [0, 0, 1, 1], [], []>} : vector<8x64xf32>, vector<64x8xf32>, vector<8x8xf32> -> vector<8x8xf32>
    %c0_62 = arith.constant 0 : index
    %c0_63 = arith.constant 0 : index
    %77 = vector.load %arg5[%c0_62, %c0_63] : memref<8x1xf32, #tpu.memory_space<vmem>>, vector<8x1xf32>
    %78 = vector.broadcast %77 : vector<8x1xf32> to vector<8x8xf32>
    %79 = arith.addf %76, %78 : vector<8x8xf32>
    %cst_64 = arith.constant 0.000000e+00 : f32
    %80 = vector.broadcast %cst_64 : f32 to vector<8x8xf32>
    %81 = arith.cmpf oge, %79, %80 : vector<8x8xf32>
    %cst_65 = arith.constant 0.00999999977 : f32
    %82 = vector.broadcast %cst_65 : f32 to vector<8x8xf32>
    %83 = arith.mulf %82, %79 : vector<8x8xf32>
    %84 = arith.select %81, %79, %83 : vector<8x8xi1>, vector<8x8xf32>
    %c0_66 = arith.constant 0 : index
    %c3_67 = arith.constant 3 : index
    %c0_68 = arith.constant 0 : index
    %c0_69 = arith.constant 0 : index
    %85 = vector.load %arg6[%c0_66, %c3_67, %c0_68, %c0_69] : memref<1x8x8x8xf32, #tpu.memory_space<vmem>>, vector<1x1x8x8xf32>
    %86 = vector.shape_cast %85 : vector<1x1x8x8xf32> to vector<8x8xf32>
    %87 = vector.shape_cast %84 : vector<8x8xf32> to vector<1x1x8x8xf32>
    tpu.vector_store %arg6[%c0_66, %c3_67, %c0_68, %c0_69], %87 {strides = array<i32>} : memref<1x8x8x8xf32, #tpu.memory_space<vmem>>, vector<1x1x8x8xf32>,
    %c0_70 = arith.constant 0 : index
    %c4_71 = arith.constant 4 : index
    %c0_72 = arith.constant 0 : index
    %c0_73 = arith.constant 0 : index
    %88 = vector.load %arg2[%c0_70, %c4_71, %c0_72, %c0_73] : memref<1x8x16x9xf32, #tpu.memory_space<vmem>>, vector<1x1x16x9xf32>
    %89 = vector.shape_cast %88 : vector<1x1x16x9xf32> to vector<16x9xf32>
    %c0_74 = arith.constant 0 : index
    %c5 = arith.constant 5 : index
    %c0_75 = arith.constant 0 : index
    %c0_76 = arith.constant 0 : index
    %90 = vector.load %arg2[%c0_74, %c5, %c0_75, %c0_76] : memref<1x8x16x9xf32, #tpu.memory_space<vmem>>, vector<1x1x16x9xf32>
    %91 = vector.shape_cast %90 : vector<1x1x16x9xf32> to vector<16x9xf32>
    %92 = vector.extract_strided_slice %89 {offsets = [0, 0], sizes = [16, 8], strides = [1, 1]} : vector<16x9xf32> to vector<16x8xf32>
    %93 = vector.extract_strided_slice %89 {offsets = [0, 1], sizes = [16, 8], strides = [1, 1]} : vector<16x9xf32> to vector<16x8xf32>
    %94 = vector.extract_strided_slice %91 {offsets = [0, 0], sizes = [16, 8], strides = [1, 1]} : vector<16x9xf32> to vector<16x8xf32>
    %95 = vector.extract_strided_slice %91 {offsets = [0, 1], sizes = [16, 8], strides = [1, 1]} : vector<16x9xf32> to vector<16x8xf32>
    %96 = tpu.concatenate %92, %93, %94, %95 in 0 : vector<16x8xf32>, vector<16x8xf32>, vector<16x8xf32>, vector<16x8xf32> -> vector<64x8xf32>
    %c0_77 = arith.constant 0 : index
    %c0_78 = arith.constant 0 : index
    %97 = vector.load %arg4[%c0_77, %c0_78] : memref<8x64xf32, #tpu.memory_space<vmem>>, vector<8x64xf32>
    %cst_79 = arith.constant dense<0.000000e+00> : vector<8x8xf32>
    %98 = tpu.matmul %97, %96, %cst_79 {dimension_numbers = #tpu.dot_dimension_numbers<[1], [0], [0], [1], [0, 0, 1, 1], [], []>} : vector<8x64xf32>, vector<64x8xf32>, vector<8x8xf32> -> vector<8x8xf32>
    %c0_80 = arith.constant 0 : index
    %c0_81 = arith.constant 0 : index
    %99 = vector.load %arg5[%c0_80, %c0_81] : memref<8x1xf32, #tpu.memory_space<vmem>>, vector<8x1xf32>
    %100 = vector.broadcast %99 : vector<8x1xf32> to vector<8x8xf32>
    %101 = arith.addf %98, %100 : vector<8x8xf32>
    %cst_82 = arith.constant 0.000000e+00 : f32
    %102 = vector.broadcast %cst_82 : f32 to vector<8x8xf32>
    %103 = arith.cmpf oge, %101, %102 : vector<8x8xf32>
    %cst_83 = arith.constant 0.00999999977 : f32
    %104 = vector.broadcast %cst_83 : f32 to vector<8x8xf32>
    %105 = arith.mulf %104, %101 : vector<8x8xf32>
    %106 = arith.select %103, %101, %105 : vector<8x8xi1>, vector<8x8xf32>
    %c0_84 = arith.constant 0 : index
    %c4_85 = arith.constant 4 : index
    %c0_86 = arith.constant 0 : index
    %c0_87 = arith.constant 0 : index
    %107 = vector.load %arg6[%c0_84, %c4_85, %c0_86, %c0_87] : memref<1x8x8x8xf32, #tpu.memory_space<vmem>>, vector<1x1x8x8xf32>
    %108 = vector.shape_cast %107 : vector<1x1x8x8xf32> to vector<8x8xf32>
    %109 = vector.shape_cast %106 : vector<8x8xf32> to vector<1x1x8x8xf32>
    tpu.vector_store %arg6[%c0_84, %c4_85, %c0_86, %c0_87], %109 {strides = array<i32>} : memref<1x8x8x8xf32, #tpu.memory_space<vmem>>, vector<1x1x8x8xf32>,
    %c0_88 = arith.constant 0 : index
    %c5_89 = arith.constant 5 : index
    %c0_90 = arith.constant 0 : index
    %c0_91 = arith.constant 0 : index
    %110 = vector.load %arg2[%c0_88, %c5_89, %c0_90, %c0_91] : memref<1x8x16x9xf32, #tpu.memory_space<vmem>>, vector<1x1x16x9xf32>
    %111 = vector.shape_cast %110 : vector<1x1x16x9xf32> to vector<16x9xf32>
    %c0_92 = arith.constant 0 : index
    %c6 = arith.constant 6 : index
    %c0_93 = arith.constant 0 : index
    %c0_94 = arith.constant 0 : index
    %112 = vector.load %arg2[%c0_92, %c6, %c0_93, %c0_94] : memref<1x8x16x9xf32, #tpu.memory_space<vmem>>, vector<1x1x16x9xf32>
    %113 = vector.shape_cast %112 : vector<1x1x16x9xf32> to vector<16x9xf32>
    %114 = vector.extract_strided_slice %111 {offsets = [0, 0], sizes = [16, 8], strides = [1, 1]} : vector<16x9xf32> to vector<16x8xf32>
    %115 = vector.extract_strided_slice %111 {offsets = [0, 1], sizes = [16, 8], strides = [1, 1]} : vector<16x9xf32> to vector<16x8xf32>
    %116 = vector.extract_strided_slice %113 {offsets = [0, 0], sizes = [16, 8], strides = [1, 1]} : vector<16x9xf32> to vector<16x8xf32>
    %117 = vector.extract_strided_slice %113 {offsets = [0, 1], sizes = [16, 8], strides = [1, 1]} : vector<16x9xf32> to vector<16x8xf32>
    %118 = tpu.concatenate %114, %115, %116, %117 in 0 : vector<16x8xf32>, vector<16x8xf32>, vector<16x8xf32>, vector<16x8xf32> -> vector<64x8xf32>
    %c0_95 = arith.constant 0 : index
    %c0_96 = arith.constant 0 : index
    %119 = vector.load %arg4[%c0_95, %c0_96] : memref<8x64xf32, #tpu.memory_space<vmem>>, vector<8x64xf32>
    %cst_97 = arith.constant dense<0.000000e+00> : vector<8x8xf32>
    %120 = tpu.matmul %119, %118, %cst_97 {dimension_numbers = #tpu.dot_dimension_numbers<[1], [0], [0], [1], [0, 0, 1, 1], [], []>} : vector<8x64xf32>, vector<64x8xf32>, vector<8x8xf32> -> vector<8x8xf32>
    %c0_98 = arith.constant 0 : index
    %c0_99 = arith.constant 0 : index
    %121 = vector.load %arg5[%c0_98, %c0_99] : memref<8x1xf32, #tpu.memory_space<vmem>>, vector<8x1xf32>
    %122 = vector.broadcast %121 : vector<8x1xf32> to vector<8x8xf32>
    %123 = arith.addf %120, %122 : vector<8x8xf32>
    %cst_100 = arith.constant 0.000000e+00 : f32
    %124 = vector.broadcast %cst_100 : f32 to vector<8x8xf32>
    %125 = arith.cmpf oge, %123, %124 : vector<8x8xf32>
    %cst_101 = arith.constant 0.00999999977 : f32
    %126 = vector.broadcast %cst_101 : f32 to vector<8x8xf32>
    %127 = arith.mulf %126, %123 : vector<8x8xf32>
    %128 = arith.select %125, %123, %127 : vector<8x8xi1>, vector<8x8xf32>
    %c0_102 = arith.constant 0 : index
    %c5_103 = arith.constant 5 : index
    %c0_104 = arith.constant 0 : index
    %c0_105 = arith.constant 0 : index
    %129 = vector.load %arg6[%c0_102, %c5_103, %c0_104, %c0_105] : memref<1x8x8x8xf32, #tpu.memory_space<vmem>>, vector<1x1x8x8xf32>
    %130 = vector.shape_cast %129 : vector<1x1x8x8xf32> to vector<8x8xf32>
    %131 = vector.shape_cast %128 : vector<8x8xf32> to vector<1x1x8x8xf32>
    tpu.vector_store %arg6[%c0_102, %c5_103, %c0_104, %c0_105], %131 {strides = array<i32>} : memref<1x8x8x8xf32, #tpu.memory_space<vmem>>, vector<1x1x8x8xf32>,
    %c0_106 = arith.constant 0 : index
    %c6_107 = arith.constant 6 : index
    %c0_108 = arith.constant 0 : index
    %c0_109 = arith.constant 0 : index
    %132 = vector.load %arg2[%c0_106, %c6_107, %c0_108, %c0_109] : memref<1x8x16x9xf32, #tpu.memory_space<vmem>>, vector<1x1x16x9xf32>
    %133 = vector.shape_cast %132 : vector<1x1x16x9xf32> to vector<16x9xf32>
    %c0_110 = arith.constant 0 : index
    %c7 = arith.constant 7 : index
    %c0_111 = arith.constant 0 : index
    %c0_112 = arith.constant 0 : index
    %134 = vector.load %arg2[%c0_110, %c7, %c0_111, %c0_112] : memref<1x8x16x9xf32, #tpu.memory_space<vmem>>, vector<1x1x16x9xf32>
    %135 = vector.shape_cast %134 : vector<1x1x16x9xf32> to vector<16x9xf32>
    %136 = vector.extract_strided_slice %133 {offsets = [0, 0], sizes = [16, 8], strides = [1, 1]} : vector<16x9xf32> to vector<16x8xf32>
    %137 = vector.extract_strided_slice %133 {offsets = [0, 1], sizes = [16, 8], strides = [1, 1]} : vector<16x9xf32> to vector<16x8xf32>
    %138 = vector.extract_strided_slice %135 {offsets = [0, 0], sizes = [16, 8], strides = [1, 1]} : vector<16x9xf32> to vector<16x8xf32>
    %139 = vector.extract_strided_slice %135 {offsets = [0, 1], sizes = [16, 8], strides = [1, 1]} : vector<16x9xf32> to vector<16x8xf32>
    %140 = tpu.concatenate %136, %137, %138, %139 in 0 : vector<16x8xf32>, vector<16x8xf32>, vector<16x8xf32>, vector<16x8xf32> -> vector<64x8xf32>
    %c0_113 = arith.constant 0 : index
    %c0_114 = arith.constant 0 : index
    %141 = vector.load %arg4[%c0_113, %c0_114] : memref<8x64xf32, #tpu.memory_space<vmem>>, vector<8x64xf32>
    %cst_115 = arith.constant dense<0.000000e+00> : vector<8x8xf32>
    %142 = tpu.matmul %141, %140, %cst_115 {dimension_numbers = #tpu.dot_dimension_numbers<[1], [0], [0], [1], [0, 0, 1, 1], [], []>} : vector<8x64xf32>, vector<64x8xf32>, vector<8x8xf32> -> vector<8x8xf32>
    %c0_116 = arith.constant 0 : index
    %c0_117 = arith.constant 0 : index
    %143 = vector.load %arg5[%c0_116, %c0_117] : memref<8x1xf32, #tpu.memory_space<vmem>>, vector<8x1xf32>
    %144 = vector.broadcast %143 : vector<8x1xf32> to vector<8x8xf32>
    %145 = arith.addf %142, %144 : vector<8x8xf32>
    %cst_118 = arith.constant 0.000000e+00 : f32
    %146 = vector.broadcast %cst_118 : f32 to vector<8x8xf32>
    %147 = arith.cmpf oge, %145, %146 : vector<8x8xf32>
    %cst_119 = arith.constant 0.00999999977 : f32
    %148 = vector.broadcast %cst_119 : f32 to vector<8x8xf32>
    %149 = arith.mulf %148, %145 : vector<8x8xf32>
    %150 = arith.select %147, %145, %149 : vector<8x8xi1>, vector<8x8xf32>
    %c0_120 = arith.constant 0 : index
    %c6_121 = arith.constant 6 : index
    %c0_122 = arith.constant 0 : index
    %c0_123 = arith.constant 0 : index
    %151 = vector.load %arg6[%c0_120, %c6_121, %c0_122, %c0_123] : memref<1x8x8x8xf32, #tpu.memory_space<vmem>>, vector<1x1x8x8xf32>
    %152 = vector.shape_cast %151 : vector<1x1x8x8xf32> to vector<8x8xf32>
    %153 = vector.shape_cast %150 : vector<8x8xf32> to vector<1x1x8x8xf32>
    tpu.vector_store %arg6[%c0_120, %c6_121, %c0_122, %c0_123], %153 {strides = array<i32>} : memref<1x8x8x8xf32, #tpu.memory_space<vmem>>, vector<1x1x8x8xf32>,
    %c0_124 = arith.constant 0 : index
    %c7_125 = arith.constant 7 : index
    %c0_126 = arith.constant 0 : index
    %c0_127 = arith.constant 0 : index
    %154 = vector.load %arg2[%c0_124, %c7_125, %c0_126, %c0_127] : memref<1x8x16x9xf32, #tpu.memory_space<vmem>>, vector<1x1x16x9xf32>
    %155 = vector.shape_cast %154 : vector<1x1x16x9xf32> to vector<16x9xf32>
    %c0_128 = arith.constant 0 : index
    %c0_129 = arith.constant 0 : index
    %c0_130 = arith.constant 0 : index
    %c0_131 = arith.constant 0 : index
    %156 = vector.load %arg3[%c0_128, %c0_129, %c0_130, %c0_131] : memref<1x1x16x9xf32, #tpu.memory_space<vmem>>, vector<1x1x16x9xf32>
    %157 = vector.shape_cast %156 : vector<1x1x16x9xf32> to vector<16x9xf32>
    %158 = vector.extract_strided_slice %155 {offsets = [0, 0], sizes = [16, 8], strides = [1, 1]} : vector<16x9xf32> to vector<16x8xf32>
    %159 = vector.extract_strided_slice %155 {offsets = [0, 1], sizes = [16, 8], strides = [1, 1]} : vector<16x9xf32> to vector<16x8xf32>
    %160 = vector.extract_strided_slice %157 {offsets = [0, 0], sizes = [16, 8], strides = [1, 1]} : vector<16x9xf32> to vector<16x8xf32>
    %161 = vector.extract_strided_slice %157 {offsets = [0, 1], sizes = [16, 8], strides = [1, 1]} : vector<16x9xf32> to vector<16x8xf32>
    %162 = tpu.concatenate %158, %159, %160, %161 in 0 : vector<16x8xf32>, vector<16x8xf32>, vector<16x8xf32>, vector<16x8xf32> -> vector<64x8xf32>
    %c0_132 = arith.constant 0 : index
    %c0_133 = arith.constant 0 : index
    %163 = vector.load %arg4[%c0_132, %c0_133] : memref<8x64xf32, #tpu.memory_space<vmem>>, vector<8x64xf32>
    %cst_134 = arith.constant dense<0.000000e+00> : vector<8x8xf32>
    %164 = tpu.matmul %163, %162, %cst_134 {dimension_numbers = #tpu.dot_dimension_numbers<[1], [0], [0], [1], [0, 0, 1, 1], [], []>} : vector<8x64xf32>, vector<64x8xf32>, vector<8x8xf32> -> vector<8x8xf32>
    %c0_135 = arith.constant 0 : index
    %c0_136 = arith.constant 0 : index
    %165 = vector.load %arg5[%c0_135, %c0_136] : memref<8x1xf32, #tpu.memory_space<vmem>>, vector<8x1xf32>
    %166 = vector.broadcast %165 : vector<8x1xf32> to vector<8x8xf32>
    %167 = arith.addf %164, %166 : vector<8x8xf32>
    %cst_137 = arith.constant 0.000000e+00 : f32
    %168 = vector.broadcast %cst_137 : f32 to vector<8x8xf32>
    %169 = arith.cmpf oge, %167, %168 : vector<8x8xf32>
    %cst_138 = arith.constant 0.00999999977 : f32
    %170 = vector.broadcast %cst_138 : f32 to vector<8x8xf32>
    %171 = arith.mulf %170, %167 : vector<8x8xf32>
    %172 = arith.select %169, %167, %171 : vector<8x8xi1>, vector<8x8xf32>
    %c0_139 = arith.constant 0 : index
    %c7_140 = arith.constant 7 : index
    %c0_141 = arith.constant 0 : index
    %c0_142 = arith.constant 0 : index
    %173 = vector.load %arg6[%c0_139, %c7_140, %c0_141, %c0_142] : memref<1x8x8x8xf32, #tpu.memory_space<vmem>>, vector<1x1x8x8xf32>
    %174 = vector.shape_cast %173 : vector<1x1x8x8xf32> to vector<8x8xf32>
    %175 = vector.shape_cast %172 : vector<8x8xf32> to vector<1x1x8x8xf32>
    tpu.vector_store %arg6[%c0_139, %c7_140, %c0_141, %c0_142], %175 {strides = array<i32>} : memref<1x8x8x8xf32, #tpu.memory_space<vmem>>, vector<1x1x8x8xf32>,
    return
  }
  func.func @transform_0(%arg0: i32, %arg1: i32) -> (i32, i32, i32, i32) {
    %c0_i32 = arith.constant 0 : i32
    %c0_i32_0 = arith.constant 0 : i32
    %c0_i32_1 = arith.constant 0 : i32
    return %arg0, %arg1, %c0_i32, %c0_i32_0 : i32, i32, i32, i32
  }
  func.func @transform_1(%arg0: i32, %arg1: i32) -> (i32, i32, i32, i32) {
    %c1_i32 = arith.constant 1 : i32
    %0 = arith.addi %arg1, %c1_i32 : i32
    %c8_i32 = arith.constant 8 : i32
    %1 = arith.muli %0, %c8_i32 : i32
    %c0_i32 = arith.constant 0 : i32
    %c0_i32_0 = arith.constant 0 : i32
    %c0_i32_1 = arith.constant 0 : i32
    return %arg0, %1, %c0_i32, %c0_i32_0 : i32, i32, i32, i32
  }
  func.func @transform_2(%arg0: i32, %arg1: i32) -> (i32, i32) {
    %c0_i32 = arith.constant 0 : i32
    %c0_i32_0 = arith.constant 0 : i32
    %c0_i32_1 = arith.constant 0 : i32
    return %c0_i32, %c0_i32_0 : i32, i32
  }
  func.func @transform_3(%arg0: i32, %arg1: i32) -> (i32, i32) {
    %c0_i32 = arith.constant 0 : i32
    %c0_i32_0 = arith.constant 0 : i32
    %c0_i32_1 = arith.constant 0 : i32
    return %c0_i32, %c0_i32_0 : i32, i32
  }
  func.func @transform_4(%arg0: i32, %arg1: i32) -> (i32, i32, i32, i32) {
    %c0_i32 = arith.constant 0 : i32
    %c0_i32_0 = arith.constant 0 : i32
    %c0_i32_1 = arith.constant 0 : i32
    return %arg0, %arg1, %c0_i32, %c0_i32_0 : i32, i32, i32, i32
  }
}

</mosaic_0001>

<llo_original>
// kernel: tpu_custom_call.1
$region0: #{tpu_custom_call.1}
  #allocation0 [shape = 'u32[]', space=smem, size = 0x4, offset = 0x4, fixed_abs, tag = 'smem constant byte address 0x4 - core index']
  #allocation1 [shape = 'u32[144,128]{1,0:T(1,128)}', space=vmem, size = 0x12000, scoped, tag = 'internal scratch']
  %s0 = inlined_call_operand.vmem [shape: f32[2,9,16,9], index: 0, kind: input, shape index: {}]
  %s1 = inlined_call_operand.vmem [shape: f32[2,9,16,9], index: 1, kind: input, shape index: {}]
  %s2 = inlined_call_operand.vmem [shape: f32[8,64], index: 2, kind: input, shape index: {}]
  %s3 = inlined_call_operand.vmem [shape: f32[8,1], index: 3, kind: input, shape index: {}]
  %s4 = inlined_call_operand.hbm [shape: f32[2,8,8,8], index: 4, kind: output, shape index: {}]
  %s5 = sld [smem:[#allocation0]]
  $region49: #{tpu_custom_call.1} parent=0
    _
  %s7 = ssub.s32 1, %s5
  %s8 = scalar_select 0, %s7, %s5
  $region1: #{tpu_custom_call.1} parent=0
    #allocation2 [shape = 'u8[65536]{0}', space=vmem, size = 0x10000, scoped, tag = 'output window, operand 0']
    #allocation3 [shape = 's32[2]{0}', space=sflag, size = 0x8, scoped, tag = 'scoped memory for tpu_custom_call.1']
    %9 = vsyncpa [#allocation3], 0
    %s10 = scalar_lea.sflag [#allocation3], 1
    %11 = vsyncpa %s10, 0
    loop: start=0, step=1, limit=4
    $region2: #{tpu_custom_call.1} parent=1 // loop_pre_header
      _
    $region3: #{tpu_custom_call.1} parent=1 // loop_header
      %s13 = sphi 0, %s17
      %p14 = scmp.ge.s32.totalorder %s13, 4
      %s20 = sphi 0, %s32
      %s21 = sphi 0, %s28
      %s22 = sphi 0, %s20
      %s23 = sphi 0, %s21
      %s24 = sphi 0, %s22
      %s25 = sphi 0, %s23
      %s37 = sphi 0, %s39
      %s40 = sphi 0, %s37
      %s41 = sphi 0, %s40
      %s57 = sphi 0, %s41
      %s69 = sphi 0, %s71
      %s72 = sphi 0, %s69
      %s73 = sphi 0, %s72
      %s89 = sphi 0, %s73
      %s93 = sphi 0, %s93
      %s95 = sphi 0, %s93
      %s96 = sphi 0, %s95
      %s110 = sphi 0, %s96
      %s114 = sphi 0, %s114
      %s116 = sphi 0, %s114
      %s117 = sphi 0, %s116
      %s131 = sphi 0, %s117
      %s139 = sphi 0, %s141
      %s142 = sphi 0, %s139
      %s143 = sphi 0, %s142
      %s159 = sphi 0, %s143
    $region4: #{tpu_custom_call.1} parent=1 // loop_header_branch
      %16 = sbr.rel (%p14) target = $region8
    $region5: #{tpu_custom_call.1} parent=1 // loop_body
      %s18 = ssub.s32 %s13, 1
      %s19 = ssub.s32 %s13, 2
      %s26 = sadd.s32 1, %s21
      %p27 = scmp.ge.s32.totalorder %s26, 1
      %s28 = scalar_select %p27, 0, %s26
      %s29 = sadd.s32 1, %s20
      %s30 = scalar_select %p27, %s29, %s20
      %p31 = scmp.ge.s32.totalorder %s30, 2
      %s32 = scalar_select %p31, 0, %s30
      %s33 = ssub.s32 %s20, %s32
      %s34 = ssub.s32 %s21, %s28
      %s35 = sor.u32 %s33, %s34
      %p36 = scmp.eq.s32.totalorder %s35, 0
      %s38 = sadd.s32 %s37, 1
      %s39 = scalar_select %p36, %s37, %s38
      %p42 = pneg %p36
      %p43 = scmp.eq.s32.totalorder %s13, 1
      %p44 = por %p42, %p43
      %p45 = scmp.ne.s32.totalorder %s37, %s40
      %p46 = scmp.eq.s32.totalorder %s13, 0
      %p47 = por %p45, %p46
      %p48 = scmp.ne.s32.totalorder %s37, %s40
      %p49 = scmp.eq.s32.totalorder %s18, 1
      %p50 = por %p48, %p49
      %p51 = scmp.ne.s32.totalorder %s40, %s41
      %p52 = scmp.eq.s32.totalorder %s18, 0
      %p53 = por %p51, %p52
      %p54 = scmp.ne.s32.totalorder %s40, %s41
      %p55 = scmp.eq.s32.totalorder %s19, 1
      %p56 = por %p54, %p55
      %p58 = scmp.ne.s32.totalorder %s41, %s57
      %p59 = scmp.eq.s32.totalorder %s19, 0
      %p60 = por %p58, %p59
      %s61 = sadd.s32 %s21, 1
      %s62 = smul.u32 %s61, 8
      %s63 = sadd.s32 %s28, 1
      %s64 = smul.u32 %s63, 8
      %s65 = ssub.s32 %s20, %s32
      %s66 = ssub.s32 %s62, %s64
      %s67 = sor.u32 %s65, %s66
      %p68 = scmp.eq.s32.totalorder %s67, 0
      %s70 = sadd.s32 %s69, 1
      %s71 = scalar_select %p68, %s69, %s70
      %p74 = pneg %p68
      %p75 = scmp.eq.s32.totalorder %s13, 1
      %p76 = por %p74, %p75
      %p77 = scmp.ne.s32.totalorder %s69, %s72
      %p78 = scmp.eq.s32.totalorder %s13, 0
      %p79 = por %p77, %p78
      %p80 = scmp.ne.s32.totalorder %s69, %s72
      %p81 = scmp.eq.s32.totalorder %s18, 1
      %p82 = por %p80, %p81
      %p83 = scmp.ne.s32.totalorder %s72, %s73
      %p84 = scmp.eq.s32.totalorder %s18, 0
      %p85 = por %p83, %p84
      %p86 = scmp.ne.s32.totalorder %s72, %s73
      %p87 = scmp.eq.s32.totalorder %s19, 1
      %p88 = por %p86, %p87
      %p90 = scmp.ne.s32.totalorder %s73, %s89
      %p91 = scmp.eq.s32.totalorder %s19, 0
      %p92 = por %p90, %p91
      %s94 = sadd.s32 %s93, 1
      %p97 = scmp.eq.s32.totalorder %s13, 1
      %p98 = scmp.ne.s32.totalorder %s93, %s95
      %p99 = scmp.eq.s32.totalorder %s13, 0
      %p100 = por %p98, %p99
      %p101 = scmp.ne.s32.totalorder %s93, %s95
      %p102 = scmp.eq.s32.totalorder %s18, 1
      %p103 = por %p101, %p102
      %p104 = scmp.ne.s32.totalorder %s95, %s96
      %p105 = scmp.eq.s32.totalorder %s18, 0
      %p106 = por %p104, %p105
      %p107 = scmp.ne.s32.totalorder %s95, %s96
      %p108 = scmp.eq.s32.totalorder %s19, 1
      %p109 = por %p107, %p108
      %p111 = scmp.ne.s32.totalorder %s96, %s110
      %p112 = scmp.eq.s32.totalorder %s19, 0
      %p113 = por %p111, %p112
      %s115 = sadd.s32 %s114, 1
      %p118 = scmp.eq.s32.totalorder %s13, 1
      %p119 = scmp.ne.s32.totalorder %s114, %s116
      %p120 = scmp.eq.s32.totalorder %s13, 0
      %p121 = por %p119, %p120
      %p122 = scmp.ne.s32.totalorder %s114, %s116
      %p123 = scmp.eq.s32.totalorder %s18, 1
      %p124 = por %p122, %p123
      %p125 = scmp.ne.s32.totalorder %s116, %s117
      %p126 = scmp.eq.s32.totalorder %s18, 0
      %p127 = por %p125, %p126
      %p128 = scmp.ne.s32.totalorder %s116, %s117
      %p129 = scmp.eq.s32.totalorder %s19, 1
      %p130 = por %p128, %p129
      %p132 = scmp.ne.s32.totalorder %s117, %s131
      %p133 = scmp.eq.s32.totalorder %s19, 0
      %p134 = por %p132, %p133
      %s135 = ssub.s32 %s20, %s32
      %s136 = ssub.s32 %s21, %s28
      %s137 = sor.u32 %s135, %s136
      %p138 = scmp.eq.s32.totalorder %s137, 0
      %s140 = sadd.s32 %s139, 1
      %s141 = scalar_select %p138, %s139, %s140
      %p144 = pneg %p138
      %p145 = scmp.eq.s32.totalorder %s13, 1
      %p146 = por %p144, %p145
      %p147 = scmp.ne.s32.totalorder %s139, %s142
      %p148 = scmp.eq.s32.totalorder %s13, 0
      %p149 = por %p147, %p148
      %p150 = scmp.ne.s32.totalorder %s139, %s142
      %p151 = scmp.eq.s32.totalorder %s18, 1
      %p152 = por %p150, %p151
      %p153 = scmp.ne.s32.totalorder %s142, %s143
      %p154 = scmp.eq.s32.totalorder %s18, 0
      %p155 = por %p153, %p154
      %p156 = scmp.ne.s32.totalorder %s142, %s143
      %p157 = scmp.eq.s32.totalorder %s19, 1
      %p158 = por %p156, %p157
      %p160 = scmp.ne.s32.totalorder %s143, %s159
      %p161 = scmp.eq.s32.totalorder %s19, 0
      %p162 = por %p160, %p161
      %p163 = scmp.le.s32.totalorder 1, %s13
      %p164 = scmp.lt.s32.totalorder %s13, 3
      %p165 = pnand %p163, %p164
      %p166 = pneg %p165
      // Predicated region
      $region9: #{tpu_custom_call.1} parent=5 // pred_check
        _
      $region10: #{tpu_custom_call.1} parent=5 // pred_check_branch
        %168 = sbr.rel (%p165) target = $region12
      $region11: #{tpu_custom_call.1} parent=5 // pred_region
        %s169 = ssub.s32 %s13, 1
        // Predicated region
        $region13: #{tpu_custom_call.1} parent=11 // pred_check
          %p170 = pneg %p106
        $region14: #{tpu_custom_call.1} parent=11 // pred_check_branch
          %172 = sbr.rel (%p170) target = $region16
        $region15: #{tpu_custom_call.1} parent=11 // pred_region
          _
        $region16: #{tpu_custom_call.1} parent=11 // pred_fallthru
          _
        // Predicated region
        $region17: #{tpu_custom_call.1} parent=11 // pred_check
          %p173 = pneg %p127
        $region18: #{tpu_custom_call.1} parent=11 // pred_check_branch
          %175 = sbr.rel (%p173) target = $region20
        $region19: #{tpu_custom_call.1} parent=11 // pred_region
          _
        $region20: #{tpu_custom_call.1} parent=11 // pred_fallthru
          _
      $region12: #{tpu_custom_call.1} parent=5 // pred_fallthru
        _
      %p176 = scmp.lt.s32.totalorder %s13, 2
      // Predicated region
      $region21: #{tpu_custom_call.1} parent=5 // pred_check
        %p177 = pneg %p176
      $region22: #{tpu_custom_call.1} parent=5 // pred_check_branch
        %179 = sbr.rel (%p177) target = $region24
      $region23: #{tpu_custom_call.1} parent=5 // pred_region
        // Predicated region
        $region25: #{tpu_custom_call.1} parent=23 // pred_check
          %p180 = pneg %p47
        $region26: #{tpu_custom_call.1} parent=23 // pred_check_branch
          %182 = sbr.rel (%p180) target = $region28
        $region27: #{tpu_custom_call.1} parent=23 // pred_region
          %s183 = smul.u32 8, %s21
          %s184 = ssub.s32 9, %s183
          %p185 = scmp.lt.s32.totalorder %s184, 8
          %s186 = scalar_select %p185, %s184, 8
          %s187 = smul.u32 128, %s186
          %s188 = smul.u32 %s187, 2
          %p189 = scmp.lt.s32.totalorder %s20, 1
          %s190 = scalar_select %p189, %s20, 1
          %p191 = scmp.lt.s32.totalorder %s183, 8
          %s192 = scalar_select %p191, %s183, 8
          %s193 = smul.addr %s192, 2
          %s194 = smul.addr %s190, 18
          %s195 = sadd.s32 %s193, %s194
          %s196 = smul.addr %s195, 8
          %s197 = scalar_lea.vmem %s0, %s196
          %s198 = smul.u32 8, %s21
          %s199 = ssub.s32 9, %s198
          %p200 = scmp.lt.s32.totalorder %s199, 8
          %s201 = scalar_select %p200, %s199, 8
          %s202 = smul.u32 128, %s201
          %s203 = smul.u32 %s202, 2
        $region28: #{tpu_custom_call.1} parent=23 // pred_fallthru
          _
        // Predicated region
        $region29: #{tpu_custom_call.1} parent=23 // pred_check
          %p204 = pneg %p79
        $region30: #{tpu_custom_call.1} parent=23 // pred_check_branch
          %206 = sbr.rel (%p204) target = $region32
        $region31: #{tpu_custom_call.1} parent=23 // pred_region
          %s207 = sadd.s32 %s21, 1
          %s208 = smul.u32 %s207, 8
          %p209 = scmp.lt.s32.totalorder %s20, 1
          %s210 = scalar_select %p209, %s20, 1
          %p211 = scmp.lt.s32.totalorder %s208, 8
          %s212 = scalar_select %p211, %s208, 8
          %s213 = smul.addr %s212, 2
          %s214 = smul.addr %s210, 18
          %s215 = sadd.s32 %s213, %s214
          %s216 = smul.addr %s215, 8
          %s217 = scalar_lea.vmem %s1, %s216
          %s218 = sadd.s32 %s21, 1
          %s219 = smul.u32 %s218, 8
        $region32: #{tpu_custom_call.1} parent=23 // pred_fallthru
          _
      $region24: #{tpu_custom_call.1} parent=5 // pred_fallthru
        _
      %p220 = scmp.le.s32.totalorder 1, %s13
      %p221 = scmp.lt.s32.totalorder %s13, 3
      %p222 = pnand %p220, %p221
      %p223 = pneg %p222
      // Predicated region
      $region33: #{tpu_custom_call.1} parent=5 // pred_check
        _
      $region34: #{tpu_custom_call.1} parent=5 // pred_check_branch
        %225 = sbr.rel (%p222) target = $region36
      $region35: #{tpu_custom_call.1} parent=5 // pred_region
        %s226 = ssub.s32 %s13, 1
        %s227 = smul.u32 8, %s23
        %s228 = ssub.s32 9, %s227
        %p229 = scmp.lt.s32.totalorder %s228, 8
        %s230 = scalar_select %p229, %s228, 8
        %s231 = smul.u32 128, %s230
        %s232 = smul.u32 %s231, 2
        %p233 = scmp.lt.s32.totalorder %s22, 1
        %s234 = scalar_select %p233, %s22, 1
        %p235 = scmp.lt.s32.totalorder %s227, 8
        %s236 = scalar_select %p235, %s227, 8
        %s237 = smul.addr %s236, 2
        %s238 = smul.addr %s234, 18
        %s239 = sadd.s32 %s237, %s238
        %s240 = smul.addr %s239, 8
        %s241 = scalar_lea.vmem %s0, %s240
        %p242 = pneg %p53
        %p243 = pneg %p50
        %s244 = sadd.s32 %s23, 1
        %s245 = smul.u32 %s244, 8
        %p246 = scmp.lt.s32.totalorder %s22, 1
        %s247 = scalar_select %p246, %s22, 1
        %p248 = scmp.lt.s32.totalorder %s245, 8
        %s249 = scalar_select %p248, %s245, 8
        %s250 = smul.addr %s249, 2
        %s251 = smul.addr %s247, 18
        %s252 = sadd.s32 %s250, %s251
        %s253 = smul.addr %s252, 8
        %s254 = scalar_lea.vmem %s1, %s253
        %p255 = pneg %p85
        %p256 = pneg %p82
        %p257 = pneg %p106
        %p258 = pneg %p103
        %p259 = pneg %p127
        %p260 = pneg %p124
        %p261 = pneg %p155
        %p262 = pneg %p152
        %s263 = sand.u32 %s142, 1
        %s264 = scalar_lea.sflag [#allocation3], %s263
        %s265 = sand.u32 %s142, 1
        %s266 = smul.addr %s265, 64
        %s267 = scalar_lea.vmem [#allocation2], %s266
        %s268 = smul.u32 8, %s23
        %s269 = ssub.s32 9, %s268
        %p270 = scmp.lt.s32.totalorder %s269, 8
        %s271 = scalar_select %p270, %s269, 8
        %s272 = smul.u32 128, %s271
        %s273 = smul.u32 %s272, 2
        %p274 = scmp.lt.s32.totalorder %s22, 1
        %s275 = scalar_select %p274, %s22, 1
        %p276 = scmp.lt.s32.totalorder %s268, 8
        %s277 = scalar_select %p276, %s268, 8
        %s278 = smul.addr %s277, 2
        %s279 = smul.addr %s275, 18
        %s280 = sadd.s32 %s278, %s279
        %s281 = smul.addr %s280, 8
        %s282 = scalar_lea.vmem %s0, %s281
        %s283 = smul.u32 8, %s23
        %s284 = ssub.s32 9, %s283
        %p285 = scmp.lt.s32.totalorder %s284, 8
        %s286 = scalar_select %p285, %s284, 8
        %s287 = smul.u32 128, %s286
        %s288 = smul.u32 %s287, 2
        %s289 = sadd.s32 %s23, 1
        %s290 = smul.u32 %s289, 8
        %p291 = scmp.lt.s32.totalorder %s22, 1
        %s292 = scalar_select %p291, %s22, 1
        %p293 = scmp.lt.s32.totalorder %s290, 8
        %s294 = scalar_select %p293, %s290, 8
        %s295 = smul.addr %s294, 2
        %s296 = smul.addr %s292, 18
        %s297 = sadd.s32 %s295, %s296
        %s298 = smul.addr %s297, 8
        %s299 = scalar_lea.vmem %s1, %s298
        %s300 = sadd.s32 %s23, 1
        %s301 = smul.u32 %s300, 8
        %s302 = smul.u32 8, %s23
        %v303 = vld [vmem:[%s282] sm:$0xff]
        %v304 = vld [vmem:[%s282 + $0x8] sm:$0xff]
        %s305 = scalar_lea.vmem %s282, 16
        %v306 = vld [vmem:[%s305] sm:$0xff]
        %v307 = vld [vmem:[%s305 + $0x8] sm:$0xff]
        %310 = vrot.lane.b32.xlu0 %v303, 127
        %v311 = vpop.permute.xlu0 %310
        %312 = vrot.lane.b32.xlu0 %v304, 127
        %v313 = vpop.permute.xlu0 %312
        %318 = vrot.lane.b32.xlu0 %v306, 127
        %v319 = vpop.permute.xlu0 %318
        %320 = vrot.lane.b32.xlu0 %v307, 127
        %v321 = vpop.permute.xlu0 %320
        %v324 = vld [vmem:[%s2] sm:$0xff]
        %v325 = vld [vmem:[%s3] sm:$0xff]
        %327 = vset.pattern.permute.xlu0 0
        %328 = vperm.xlu0 %327, %v325
        %v329 = vpop.permute.xlu0 %328
        %vm331 = vcmask 523264
        %v333 = vsel %vm331, %v324, 0
        %335 = vmatprep.subr.mxu0 0.0
        %336 = vmatpush1.msra.mxu0 0.0
        %337 = vmatprep.subr.mxu0 0.0
        %338 = vmatpush1.msra.mxu0 0.0
        %339 = vmatprep.subr.mxu0 0.0
        %340 = vmatpush1.msra.mxu0 0.0
        %341 = vmatprep.subr.mxu0 0.0
        %342 = vmatpush1.msra.mxu0 0.0
        %343 = vmatprep.subr.mxu0 0.0
        %344 = vmatpush1.msra.mxu0 0.0
        %345 = vmatprep.subr.mxu0 0.0
        %346 = vmatpush1.msra.mxu0 0.0
        %347 = vmatprep.subr.mxu0 0.0
        %348 = vmatpush1.msra.mxu0 0.0
        %349 = vmatprep.subr.mxu0 0.0
        %350 = vmatpush1.msra.mxu0 0.0
        %351 = vmatprep.subr.mxu0 0.0
        %352 = vmatpush1.msra.mxu0 %v321
        %353 = vmatprep.subr.mxu0 0.0
        %354 = vmatpush1.msra.mxu0 %v319
        %355 = vmatprep.subr.mxu0 0.0
        %356 = vmatpush1.msra.mxu0 %v307
        %357 = vmatprep.subr.mxu0 0.0
        %358 = vmatpush1.msra.mxu0 %v306
        %359 = vmatprep.subr.mxu0 0.0
        %360 = vmatpush1.msra.mxu0 %v313
        %361 = vmatprep.subr.mxu0 0.0
        %362 = vmatpush1.msra.mxu0 %v311
        %363 = vmatprep.subr.mxu0 0.0
        %364 = vmatpush1.msra.mxu0 %v304
        %365 = vmatprep.subr.mxu0 0.0
        %366 = vmatpush1.msra.mxu0 %v303
        %367 = vmatprep.subr.mxu0 0.0
        %368 = vmatpush2.msra.mxu0 0.0
        %369 = vmatprep.subr.mxu0 0.0
        %370 = vmatpush2.msra.mxu0 0.0
        %371 = vmatprep.subr.mxu0 0.0
        %372 = vmatpush2.msra.mxu0 0.0
        %373 = vmatprep.subr.mxu0 0.0
        %374 = vmatpush2.msra.mxu0 0.0
        %375 = vmatprep.subr.mxu0 0.0
        %376 = vmatpush2.msra.mxu0 0.0
        %377 = vmatprep.subr.mxu0 0.0
        %378 = vmatpush2.msra.mxu0 0.0
        %379 = vmatprep.subr.mxu0 0.0
        %380 = vmatpush2.msra.mxu0 0.0
        %381 = vmatprep.subr.mxu0 0.0
        %382 = vmatpush2.msra.mxu0 0.0
        %383 = vmatprep.subr.mxu0 0.0
        %384 = vmatpush2.msra.mxu0 0.0
        %385 = vmatprep.subr.mxu0 0.0
        %386 = vmatpush2.msra.mxu0 0.0
        %387 = vmatprep.subr.mxu0 0.0
        %388 = vmatpush2.msra.mxu0 0.0
        %389 = vmatprep.subr.mxu0 0.0
        %390 = vmatpush2.msra.mxu0 0.0
        %391 = vmatprep.subr.mxu0 0.0
        %392 = vmatpush2.msra.mxu0 0.0
        %393 = vmatprep.subr.mxu0 0.0
        %394 = vmatpush2.msra.mxu0 0.0
        %395 = vmatprep.subr.mxu0 0.0
        %396 = vmatpush2.msra.mxu0 0.0
        %397 = vmatprep.subr.mxu0 0.0
        %398 = vmatpush2.msra.mxu0 0.0
        %399 = vmatprep.mubr.f32.mxu0 0.0
        %400 = vmatmul.mubr.f32.gmra.mxu0 %v333
        %v401 = vpop.f32.mrf.mxu0
        %v402 = vadd.f32 %v329, %v401
        %v403 = vpop.f32.mrf.mxu0
        %404 = vdwg.mxu0
        %vm405 = vcmp.ge.f32.partialorder %v402, 0.0
        %v406 = vmul.f32 %v402, 0.01
        %v407 = vsel %vm405, %v402, %v406
        %vm408 = vcmask 64512
        %409 = vst.msk [vmem:[%s267] sm:$0xff] %vm408, %v407
        %v410 = vld [vmem:[%s305] sm:$0xff]
        %v411 = vld [vmem:[%s305 + $0x8] sm:$0xff]
        %s412 = scalar_lea.vmem %s282, 32
        %v413 = vld [vmem:[%s412] sm:$0xff]
        %v414 = vld [vmem:[%s412 + $0x8] sm:$0xff]
        %417 = vrot.lane.b32.xlu0 %v410, 127
        %v418 = vpop.permute.xlu0 %417
        %419 = vrot.lane.b32.xlu0 %v411, 127
        %v420 = vpop.permute.xlu0 %419
        %425 = vrot.lane.b32.xlu0 %v413, 127
        %v426 = vpop.permute.xlu0 %425
        %427 = vrot.lane.b32.xlu0 %v414, 127
        %v428 = vpop.permute.xlu0 %427
        %v431 = vld [vmem:[%s2] sm:$0xff]
        %v432 = vld [vmem:[%s3] sm:$0xff]
        %434 = vset.pattern.permute.xlu0 0
        %435 = vperm.xlu0 %434, %v432
        %v436 = vpop.permute.xlu0 %435
        %v439 = vsel %vm331, %v431, 0
        %441 = vmatprep.subr.mxu0 0.0
        %442 = vmatpush1.msra.mxu0 0.0
        %443 = vmatprep.subr.mxu0 0.0
        %444 = vmatpush1.msra.mxu0 0.0
        %445 = vmatprep.subr.mxu0 0.0
        %446 = vmatpush1.msra.mxu0 0.0
        %447 = vmatprep.subr.mxu0 0.0
        %448 = vmatpush1.msra.mxu0 0.0
        %449 = vmatprep.subr.mxu0 0.0
        %450 = vmatpush1.msra.mxu0 0.0
        %451 = vmatprep.subr.mxu0 0.0
        %452 = vmatpush1.msra.mxu0 0.0
        %453 = vmatprep.subr.mxu0 0.0
        %454 = vmatpush1.msra.mxu0 0.0
        %455 = vmatprep.subr.mxu0 0.0
        %456 = vmatpush1.msra.mxu0 0.0
        %457 = vmatprep.subr.mxu0 0.0
        %458 = vmatpush1.msra.mxu0 %v428
        %459 = vmatprep.subr.mxu0 0.0
        %460 = vmatpush1.msra.mxu0 %v426
        %461 = vmatprep.subr.mxu0 0.0
        %462 = vmatpush1.msra.mxu0 %v414
        %463 = vmatprep.subr.mxu0 0.0
        %464 = vmatpush1.msra.mxu0 %v413
        %465 = vmatprep.subr.mxu0 0.0
        %466 = vmatpush1.msra.mxu0 %v420
        %467 = vmatprep.subr.mxu0 0.0
        %468 = vmatpush1.msra.mxu0 %v418
        %469 = vmatprep.subr.mxu0 0.0
        %470 = vmatpush1.msra.mxu0 %v411
        %471 = vmatprep.subr.mxu0 0.0
        %472 = vmatpush1.msra.mxu0 %v410
        %473 = vmatprep.subr.mxu0 0.0
        %474 = vmatpush2.msra.mxu0 0.0
        %475 = vmatprep.subr.mxu0 0.0
        %476 = vmatpush2.msra.mxu0 0.0
        %477 = vmatprep.subr.mxu0 0.0
        %478 = vmatpush2.msra.mxu0 0.0
        %479 = vmatprep.subr.mxu0 0.0
        %480 = vmatpush2.msra.mxu0 0.0
        %481 = vmatprep.subr.mxu0 0.0
        %482 = vmatpush2.msra.mxu0 0.0
        %483 = vmatprep.subr.mxu0 0.0
        %484 = vmatpush2.msra.mxu0 0.0
        %485 = vmatprep.subr.mxu0 0.0
        %486 = vmatpush2.msra.mxu0 0.0
        %487 = vmatprep.subr.mxu0 0.0
        %488 = vmatpush2.msra.mxu0 0.0
        %489 = vmatprep.subr.mxu0 0.0
        %490 = vmatpush2.msra.mxu0 0.0
        %491 = vmatprep.subr.mxu0 0.0
        %492 = vmatpush2.msra.mxu0 0.0
        %493 = vmatprep.subr.mxu0 0.0
        %494 = vmatpush2.msra.mxu0 0.0
        %495 = vmatprep.subr.mxu0 0.0
        %496 = vmatpush2.msra.mxu0 0.0
        %497 = vmatprep.subr.mxu0 0.0
        %498 = vmatpush2.msra.mxu0 0.0
        %499 = vmatprep.subr.mxu0 0.0
        %500 = vmatpush2.msra.mxu0 0.0
        %501 = vmatprep.subr.mxu0 0.0
        %502 = vmatpush2.msra.mxu0 0.0
        %503 = vmatprep.subr.mxu0 0.0
        %504 = vmatpush2.msra.mxu0 0.0
        %505 = vmatprep.mubr.f32.mxu0 0.0
        %506 = vmatmul.mubr.f32.gmra.mxu0 %v439
        %v507 = vpop.f32.mrf.mxu0
        %v508 = vadd.f32 %v436, %v507
        %v509 = vpop.f32.mrf.mxu0
        %510 = vdwg.mxu0
        %vm511 = vcmp.ge.f32.partialorder %v508, 0.0
        %v512 = vmul.f32 %v508, 0.01
        %v513 = vsel %vm511, %v508, %v512
        %s514 = scalar_lea.vmem %s267, 8 [#allocation2]
        %515 = vst.msk [vmem:[%s514] sm:$0xff] %vm408, %v513
        %v516 = vld [vmem:[%s412] sm:$0xff]
        %v517 = vld [vmem:[%s412 + $0x8] sm:$0xff]
        %s518 = scalar_lea.vmem %s282, 48
        %v519 = vld [vmem:[%s518] sm:$0xff]
        %v520 = vld [vmem:[%s518 + $0x8] sm:$0xff]
        %523 = vrot.lane.b32.xlu0 %v516, 127
        %v524 = vpop.permute.xlu0 %523
        %525 = vrot.lane.b32.xlu0 %v517, 127
        %v526 = vpop.permute.xlu0 %525
        %531 = vrot.lane.b32.xlu0 %v519, 127
        %v532 = vpop.permute.xlu0 %531
        %533 = vrot.lane.b32.xlu0 %v520, 127
        %v534 = vpop.permute.xlu0 %533
        %v537 = vld [vmem:[%s2] sm:$0xff]
        %v538 = vld [vmem:[%s3] sm:$0xff]
        %540 = vset.pattern.permute.xlu0 0
        %541 = vperm.xlu0 %540, %v538
        %v542 = vpop.permute.xlu0 %541
        %v545 = vsel %vm331, %v537, 0
        %547 = vmatprep.subr.mxu0 0.0
        %548 = vmatpush1.msra.mxu0 0.0
        %549 = vmatprep.subr.mxu0 0.0
        %550 = vmatpush1.msra.mxu0 0.0
        %551 = vmatprep.subr.mxu0 0.0
        %552 = vmatpush1.msra.mxu0 0.0
        %553 = vmatprep.subr.mxu0 0.0
        %554 = vmatpush1.msra.mxu0 0.0
        %555 = vmatprep.subr.mxu0 0.0
        %556 = vmatpush1.msra.mxu0 0.0
        %557 = vmatprep.subr.mxu0 0.0
        %558 = vmatpush1.msra.mxu0 0.0
        %559 = vmatprep.subr.mxu0 0.0
        %560 = vmatpush1.msra.mxu0 0.0
        %561 = vmatprep.subr.mxu0 0.0
        %562 = vmatpush1.msra.mxu0 0.0
        %563 = vmatprep.subr.mxu0 0.0
        %564 = vmatpush1.msra.mxu0 %v534
        %565 = vmatprep.subr.mxu0 0.0
        %566 = vmatpush1.msra.mxu0 %v532
        %567 = vmatprep.subr.mxu0 0.0
        %568 = vmatpush1.msra.mxu0 %v520
        %569 = vmatprep.subr.mxu0 0.0
        %570 = vmatpush1.msra.mxu0 %v519
        %571 = vmatprep.subr.mxu0 0.0
        %572 = vmatpush1.msra.mxu0 %v526
        %573 = vmatprep.subr.mxu0 0.0
        %574 = vmatpush1.msra.mxu0 %v524
        %575 = vmatprep.subr.mxu0 0.0
        %576 = vmatpush1.msra.mxu0 %v517
        %577 = vmatprep.subr.mxu0 0.0
        %578 = vmatpush1.msra.mxu0 %v516
        %579 = vmatprep.subr.mxu0 0.0
        %580 = vmatpush2.msra.mxu0 0.0
        %581 = vmatprep.subr.mxu0 0.0
        %582 = vmatpush2.msra.mxu0 0.0
        %583 = vmatprep.subr.mxu0 0.0
        %584 = vmatpush2.msra.mxu0 0.0
        %585 = vmatprep.subr.mxu0 0.0
        %586 = vmatpush2.msra.mxu0 0.0
        %587 = vmatprep.subr.mxu0 0.0
        %588 = vmatpush2.msra.mxu0 0.0
        %589 = vmatprep.subr.mxu0 0.0
        %590 = vmatpush2.msra.mxu0 0.0
        %591 = vmatprep.subr.mxu0 0.0
        %592 = vmatpush2.msra.mxu0 0.0
        %593 = vmatprep.subr.mxu0 0.0
        %594 = vmatpush2.msra.mxu0 0.0
        %595 = vmatprep.subr.mxu0 0.0
        %596 = vmatpush2.msra.mxu0 0.0
        %597 = vmatprep.subr.mxu0 0.0
        %598 = vmatpush2.msra.mxu0 0.0
        %599 = vmatprep.subr.mxu0 0.0
        %600 = vmatpush2.msra.mxu0 0.0
        %601 = vmatprep.subr.mxu0 0.0
        %602 = vmatpush2.msra.mxu0 0.0
        %603 = vmatprep.subr.mxu0 0.0
        %604 = vmatpush2.msra.mxu0 0.0
        %605 = vmatprep.subr.mxu0 0.0
        %606 = vmatpush2.msra.mxu0 0.0
        %607 = vmatprep.subr.mxu0 0.0
        %608 = vmatpush2.msra.mxu0 0.0
        %609 = vmatprep.subr.mxu0 0.0
        %610 = vmatpush2.msra.mxu0 0.0
        %611 = vmatprep.mubr.f32.mxu0 0.0
        %612 = vmatmul.mubr.f32.gmra.mxu0 %v545
        %v613 = vpop.f32.mrf.mxu0
        %v614 = vadd.f32 %v542, %v613
        %v615 = vpop.f32.mrf.mxu0
        %616 = vdwg.mxu0
        %vm617 = vcmp.ge.f32.partialorder %v614, 0.0
        %v618 = vmul.f32 %v614, 0.01
        %v619 = vsel %vm617, %v614, %v618
        %s620 = scalar_lea.vmem %s267, 16 [#allocation2]
        %621 = vst.msk [vmem:[%s620] sm:$0xff] %vm408, %v619
        %v622 = vld [vmem:[%s518] sm:$0xff]
        %v623 = vld [vmem:[%s518 + $0x8] sm:$0xff]
        %s624 = scalar_lea.vmem %s282, 64
        %v625 = vld [vmem:[%s624] sm:$0xff]
        %v626 = vld [vmem:[%s624 + $0x8] sm:$0xff]
        %629 = vrot.lane.b32.xlu0 %v622, 127
        %v630 = vpop.permute.xlu0 %629
        %631 = vrot.lane.b32.xlu0 %v623, 127
        %v632 = vpop.permute.xlu0 %631
        %637 = vrot.lane.b32.xlu0 %v625, 127
        %v638 = vpop.permute.xlu0 %637
        %639 = vrot.lane.b32.xlu0 %v626, 127
        %v640 = vpop.permute.xlu0 %639
        %v643 = vld [vmem:[%s2] sm:$0xff]
        %v644 = vld [vmem:[%s3] sm:$0xff]
        %646 = vset.pattern.permute.xlu0 0
        %647 = vperm.xlu0 %646, %v644
        %v648 = vpop.permute.xlu0 %647
        %v651 = vsel %vm331, %v643, 0
        %653 = vmatprep.subr.mxu0 0.0
        %654 = vmatpush1.msra.mxu0 0.0
        %655 = vmatprep.subr.mxu0 0.0
        %656 = vmatpush1.msra.mxu0 0.0
        %657 = vmatprep.subr.mxu0 0.0
        %658 = vmatpush1.msra.mxu0 0.0
        %659 = vmatprep.subr.mxu0 0.0
        %660 = vmatpush1.msra.mxu0 0.0
        %661 = vmatprep.subr.mxu0 0.0
        %662 = vmatpush1.msra.mxu0 0.0
        %663 = vmatprep.subr.mxu0 0.0
        %664 = vmatpush1.msra.mxu0 0.0
        %665 = vmatprep.subr.mxu0 0.0
        %666 = vmatpush1.msra.mxu0 0.0
        %667 = vmatprep.subr.mxu0 0.0
        %668 = vmatpush1.msra.mxu0 0.0
        %669 = vmatprep.subr.mxu0 0.0
        %670 = vmatpush1.msra.mxu0 %v640
        %671 = vmatprep.subr.mxu0 0.0
        %672 = vmatpush1.msra.mxu0 %v638
        %673 = vmatprep.subr.mxu0 0.0
        %674 = vmatpush1.msra.mxu0 %v626
        %675 = vmatprep.subr.mxu0 0.0
        %676 = vmatpush1.msra.mxu0 %v625
        %677 = vmatprep.subr.mxu0 0.0
        %678 = vmatpush1.msra.mxu0 %v632
        %679 = vmatprep.subr.mxu0 0.0
        %680 = vmatpush1.msra.mxu0 %v630
        %681 = vmatprep.subr.mxu0 0.0
        %682 = vmatpush1.msra.mxu0 %v623
        %683 = vmatprep.subr.mxu0 0.0
        %684 = vmatpush1.msra.mxu0 %v622
        %685 = vmatprep.subr.mxu0 0.0
        %686 = vmatpush2.msra.mxu0 0.0
        %687 = vmatprep.subr.mxu0 0.0
        %688 = vmatpush2.msra.mxu0 0.0
        %689 = vmatprep.subr.mxu0 0.0
        %690 = vmatpush2.msra.mxu0 0.0
        %691 = vmatprep.subr.mxu0 0.0
        %692 = vmatpush2.msra.mxu0 0.0
        %693 = vmatprep.subr.mxu0 0.0
        %694 = vmatpush2.msra.mxu0 0.0
        %695 = vmatprep.subr.mxu0 0.0
        %696 = vmatpush2.msra.mxu0 0.0
        %697 = vmatprep.subr.mxu0 0.0
        %698 = vmatpush2.msra.mxu0 0.0
        %699 = vmatprep.subr.mxu0 0.0
        %700 = vmatpush2.msra.mxu0 0.0
        %701 = vmatprep.subr.mxu0 0.0
        %702 = vmatpush2.msra.mxu0 0.0
        %703 = vmatprep.subr.mxu0 0.0
        %704 = vmatpush2.msra.mxu0 0.0
        %705 = vmatprep.subr.mxu0 0.0
        %706 = vmatpush2.msra.mxu0 0.0
        %707 = vmatprep.subr.mxu0 0.0
        %708 = vmatpush2.msra.mxu0 0.0
        %709 = vmatprep.subr.mxu0 0.0
        %710 = vmatpush2.msra.mxu0 0.0
        %711 = vmatprep.subr.mxu0 0.0
        %712 = vmatpush2.msra.mxu0 0.0
        %713 = vmatprep.subr.mxu0 0.0
        %714 = vmatpush2.msra.mxu0 0.0
        %715 = vmatprep.subr.mxu0 0.0
        %716 = vmatpush2.msra.mxu0 0.0
        %717 = vmatprep.mubr.f32.mxu0 0.0
        %718 = vmatmul.mubr.f32.gmra.mxu0 %v651
        %v719 = vpop.f32.mrf.mxu0
        %v720 = vadd.f32 %v648, %v719
        %v721 = vpop.f32.mrf.mxu0
        %722 = vdwg.mxu0
        %vm723 = vcmp.ge.f32.partialorder %v720, 0.0
        %v724 = vmul.f32 %v720, 0.01
        %v725 = vsel %vm723, %v720, %v724
        %s726 = scalar_lea.vmem %s267, 24 [#allocation2]
        %727 = vst.msk [vmem:[%s726] sm:$0xff] %vm408, %v725
        %v728 = vld [vmem:[%s624] sm:$0xff]
        %v729 = vld [vmem:[%s624 + $0x8] sm:$0xff]
        %s730 = scalar_lea.vmem %s282, 80
        %v731 = vld [vmem:[%s730] sm:$0xff]
        %v732 = vld [vmem:[%s730 + $0x8] sm:$0xff]
        %735 = vrot.lane.b32.xlu0 %v728, 127
        %v736 = vpop.permute.xlu0 %735
        %737 = vrot.lane.b32.xlu0 %v729, 127
        %v738 = vpop.permute.xlu0 %737
        %743 = vrot.lane.b32.xlu0 %v731, 127
        %v744 = vpop.permute.xlu0 %743
        %745 = vrot.lane.b32.xlu0 %v732, 127
        %v746 = vpop.permute.xlu0 %745
        %v749 = vld [vmem:[%s2] sm:$0xff]
        %v750 = vld [vmem:[%s3] sm:$0xff]
        %752 = vset.pattern.permute.xlu0 0
        %753 = vperm.xlu0 %752, %v750
        %v754 = vpop.permute.xlu0 %753
        %v757 = vsel %vm331, %v749, 0
        %759 = vmatprep.subr.mxu0 0.0
        %760 = vmatpush1.msra.mxu0 0.0
        %761 = vmatprep.subr.mxu0 0.0
        %762 = vmatpush1.msra.mxu0 0.0
        %763 = vmatprep.subr.mxu0 0.0
        %764 = vmatpush1.msra.mxu0 0.0
        %765 = vmatprep.subr.mxu0 0.0
        %766 = vmatpush1.msra.mxu0 0.0
        %767 = vmatprep.subr.mxu0 0.0
        %768 = vmatpush1.msra.mxu0 0.0
        %769 = vmatprep.subr.mxu0 0.0
        %770 = vmatpush1.msra.mxu0 0.0
        %771 = vmatprep.subr.mxu0 0.0
        %772 = vmatpush1.msra.mxu0 0.0
        %773 = vmatprep.subr.mxu0 0.0
        %774 = vmatpush1.msra.mxu0 0.0
        %775 = vmatprep.subr.mxu0 0.0
        %776 = vmatpush1.msra.mxu0 %v746
        %777 = vmatprep.subr.mxu0 0.0
        %778 = vmatpush1.msra.mxu0 %v744
        %779 = vmatprep.subr.mxu0 0.0
        %780 = vmatpush1.msra.mxu0 %v732
        %781 = vmatprep.subr.mxu0 0.0
        %782 = vmatpush1.msra.mxu0 %v731
        %783 = vmatprep.subr.mxu0 0.0
        %784 = vmatpush1.msra.mxu0 %v738
        %785 = vmatprep.subr.mxu0 0.0
        %786 = vmatpush1.msra.mxu0 %v736
        %787 = vmatprep.subr.mxu0 0.0
        %788 = vmatpush1.msra.mxu0 %v729
        %789 = vmatprep.subr.mxu0 0.0
        %790 = vmatpush1.msra.mxu0 %v728
        %791 = vmatprep.subr.mxu0 0.0
        %792 = vmatpush2.msra.mxu0 0.0
        %793 = vmatprep.subr.mxu0 0.0
        %794 = vmatpush2.msra.mxu0 0.0
        %795 = vmatprep.subr.mxu0 0.0
        %796 = vmatpush2.msra.mxu0 0.0
        %797 = vmatprep.subr.mxu0 0.0
        %798 = vmatpush2.msra.mxu0 0.0
        %799 = vmatprep.subr.mxu0 0.0
        %800 = vmatpush2.msra.mxu0 0.0
        %801 = vmatprep.subr.mxu0 0.0
        %802 = vmatpush2.msra.mxu0 0.0
        %803 = vmatprep.subr.mxu0 0.0
        %804 = vmatpush2.msra.mxu0 0.0
        %805 = vmatprep.subr.mxu0 0.0
        %806 = vmatpush2.msra.mxu0 0.0
        %807 = vmatprep.subr.mxu0 0.0
        %808 = vmatpush2.msra.mxu0 0.0
        %809 = vmatprep.subr.mxu0 0.0
        %810 = vmatpush2.msra.mxu0 0.0
        %811 = vmatprep.subr.mxu0 0.0
        %812 = vmatpush2.msra.mxu0 0.0
        %813 = vmatprep.subr.mxu0 0.0
        %814 = vmatpush2.msra.mxu0 0.0
        %815 = vmatprep.subr.mxu0 0.0
        %816 = vmatpush2.msra.mxu0 0.0
        %817 = vmatprep.subr.mxu0 0.0
        %818 = vmatpush2.msra.mxu0 0.0
        %819 = vmatprep.subr.mxu0 0.0
        %820 = vmatpush2.msra.mxu0 0.0
        %821 = vmatprep.subr.mxu0 0.0
        %822 = vmatpush2.msra.mxu0 0.0
        %823 = vmatprep.mubr.f32.mxu0 0.0
        %824 = vmatmul.mubr.f32.gmra.mxu0 %v757
        %v825 = vpop.f32.mrf.mxu0
        %v826 = vadd.f32 %v754, %v825
        %v827 = vpop.f32.mrf.mxu0
        %828 = vdwg.mxu0
        %vm829 = vcmp.ge.f32.partialorder %v826, 0.0
        %v830 = vmul.f32 %v826, 0.01
        %v831 = vsel %vm829, %v826, %v830
        %s832 = scalar_lea.vmem %s267, 32 [#allocation2]
        %833 = vst.msk [vmem:[%s832] sm:$0xff] %vm408, %v831
        %v834 = vld [vmem:[%s730] sm:$0xff]
        %v835 = vld [vmem:[%s730 + $0x8] sm:$0xff]
        %s836 = scalar_lea.vmem %s282, 96
        %v837 = vld [vmem:[%s836] sm:$0xff]
        %v838 = vld [vmem:[%s836 + $0x8] sm:$0xff]
        %841 = vrot.lane.b32.xlu0 %v834, 127
        %v842 = vpop.permute.xlu0 %841
        %843 = vrot.lane.b32.xlu0 %v835, 127
        %v844 = vpop.permute.xlu0 %843
        %849 = vrot.lane.b32.xlu0 %v837, 127
        %v850 = vpop.permute.xlu0 %849
        %851 = vrot.lane.b32.xlu0 %v838, 127
        %v852 = vpop.permute.xlu0 %851
        %v855 = vld [vmem:[%s2] sm:$0xff]
        %v856 = vld [vmem:[%s3] sm:$0xff]
        %858 = vset.pattern.permute.xlu0 0
        %859 = vperm.xlu0 %858, %v856
        %v860 = vpop.permute.xlu0 %859
        %v863 = vsel %vm331, %v855, 0
        %865 = vmatprep.subr.mxu0 0.0
        %866 = vmatpush1.msra.mxu0 0.0
        %867 = vmatprep.subr.mxu0 0.0
        %868 = vmatpush1.msra.mxu0 0.0
        %869 = vmatprep.subr.mxu0 0.0
        %870 = vmatpush1.msra.mxu0 0.0
        %871 = vmatprep.subr.mxu0 0.0
        %872 = vmatpush1.msra.mxu0 0.0
        %873 = vmatprep.subr.mxu0 0.0
        %874 = vmatpush1.msra.mxu0 0.0
        %875 = vmatprep.subr.mxu0 0.0
        %876 = vmatpush1.msra.mxu0 0.0
        %877 = vmatprep.subr.mxu0 0.0
        %878 = vmatpush1.msra.mxu0 0.0
        %879 = vmatprep.subr.mxu0 0.0
        %880 = vmatpush1.msra.mxu0 0.0
        %881 = vmatprep.subr.mxu0 0.0
        %882 = vmatpush1.msra.mxu0 %v852
        %883 = vmatprep.subr.mxu0 0.0
        %884 = vmatpush1.msra.mxu0 %v850
        %885 = vmatprep.subr.mxu0 0.0
        %886 = vmatpush1.msra.mxu0 %v838
        %887 = vmatprep.subr.mxu0 0.0
        %888 = vmatpush1.msra.mxu0 %v837
        %889 = vmatprep.subr.mxu0 0.0
        %890 = vmatpush1.msra.mxu0 %v844
        %891 = vmatprep.subr.mxu0 0.0
        %892 = vmatpush1.msra.mxu0 %v842
        %893 = vmatprep.subr.mxu0 0.0
        %894 = vmatpush1.msra.mxu0 %v835
        %895 = vmatprep.subr.mxu0 0.0
        %896 = vmatpush1.msra.mxu0 %v834
        %897 = vmatprep.subr.mxu0 0.0
        %898 = vmatpush2.msra.mxu0 0.0
        %899 = vmatprep.subr.mxu0 0.0
        %900 = vmatpush2.msra.mxu0 0.0
        %901 = vmatprep.subr.mxu0 0.0
        %902 = vmatpush2.msra.mxu0 0.0
        %903 = vmatprep.subr.mxu0 0.0
        %904 = vmatpush2.msra.mxu0 0.0
        %905 = vmatprep.subr.mxu0 0.0
        %906 = vmatpush2.msra.mxu0 0.0
        %907 = vmatprep.subr.mxu0 0.0
        %908 = vmatpush2.msra.mxu0 0.0
        %909 = vmatprep.subr.mxu0 0.0
        %910 = vmatpush2.msra.mxu0 0.0
        %911 = vmatprep.subr.mxu0 0.0
        %912 = vmatpush2.msra.mxu0 0.0
        %913 = vmatprep.subr.mxu0 0.0
        %914 = vmatpush2.msra.mxu0 0.0
        %915 = vmatprep.subr.mxu0 0.0
        %916 = vmatpush2.msra.mxu0 0.0
        %917 = vmatprep.subr.mxu0 0.0
        %918 = vmatpush2.msra.mxu0 0.0
        %919 = vmatprep.subr.mxu0 0.0
        %920 = vmatpush2.msra.mxu0 0.0
        %921 = vmatprep.subr.mxu0 0.0
        %922 = vmatpush2.msra.mxu0 0.0
        %923 = vmatprep.subr.mxu0 0.0
        %924 = vmatpush2.msra.mxu0 0.0
        %925 = vmatprep.subr.mxu0 0.0
        %926 = vmatpush2.msra.mxu0 0.0
        %927 = vmatprep.subr.mxu0 0.0
        %928 = vmatpush2.msra.mxu0 0.0
        %929 = vmatprep.mubr.f32.mxu0 0.0
        %930 = vmatmul.mubr.f32.gmra.mxu0 %v863
        %v931 = vpop.f32.mrf.mxu0
        %v932 = vadd.f32 %v860, %v931
        %v933 = vpop.f32.mrf.mxu0
        %934 = vdwg.mxu0
        %vm935 = vcmp.ge.f32.partialorder %v932, 0.0
        %v936 = vmul.f32 %v932, 0.01
        %v937 = vsel %vm935, %v932, %v936
        %s938 = scalar_lea.vmem %s267, 40 [#allocation2]
        %939 = vst.msk [vmem:[%s938] sm:$0xff] %vm408, %v937
        %v940 = vld [vmem:[%s836] sm:$0xff]
        %v941 = vld [vmem:[%s836 + $0x8] sm:$0xff]
        %s942 = scalar_lea.vmem %s282, 112
        %v943 = vld [vmem:[%s942] sm:$0xff]
        %v944 = vld [vmem:[%s942 + $0x8] sm:$0xff]
        %947 = vrot.lane.b32.xlu0 %v940, 127
        %v948 = vpop.permute.xlu0 %947
        %949 = vrot.lane.b32.xlu0 %v941, 127
        %v950 = vpop.permute.xlu0 %949
        %955 = vrot.lane.b32.xlu0 %v943, 127
        %v956 = vpop.permute.xlu0 %955
        %957 = vrot.lane.b32.xlu0 %v944, 127
        %v958 = vpop.permute.xlu0 %957
        %v961 = vld [vmem:[%s2] sm:$0xff]
        %v962 = vld [vmem:[%s3] sm:$0xff]
        %964 = vset.pattern.permute.xlu0 0
        %965 = vperm.xlu0 %964, %v962
        %v966 = vpop.permute.xlu0 %965
        %v969 = vsel %vm331, %v961, 0
        %971 = vmatprep.subr.mxu0 0.0
        %972 = vmatpush1.msra.mxu0 0.0
        %973 = vmatprep.subr.mxu0 0.0
        %974 = vmatpush1.msra.mxu0 0.0
        %975 = vmatprep.subr.mxu0 0.0
        %976 = vmatpush1.msra.mxu0 0.0
        %977 = vmatprep.subr.mxu0 0.0
        %978 = vmatpush1.msra.mxu0 0.0
        %979 = vmatprep.subr.mxu0 0.0
        %980 = vmatpush1.msra.mxu0 0.0
        %981 = vmatprep.subr.mxu0 0.0
        %982 = vmatpush1.msra.mxu0 0.0
        %983 = vmatprep.subr.mxu0 0.0
        %984 = vmatpush1.msra.mxu0 0.0
        %985 = vmatprep.subr.mxu0 0.0
        %986 = vmatpush1.msra.mxu0 0.0
        %987 = vmatprep.subr.mxu0 0.0
        %988 = vmatpush1.msra.mxu0 %v958
        %989 = vmatprep.subr.mxu0 0.0
        %990 = vmatpush1.msra.mxu0 %v956
        %991 = vmatprep.subr.mxu0 0.0
        %992 = vmatpush1.msra.mxu0 %v944
        %993 = vmatprep.subr.mxu0 0.0
        %994 = vmatpush1.msra.mxu0 %v943
        %995 = vmatprep.subr.mxu0 0.0
        %996 = vmatpush1.msra.mxu0 %v950
        %997 = vmatprep.subr.mxu0 0.0
        %998 = vmatpush1.msra.mxu0 %v948
        %999 = vmatprep.subr.mxu0 0.0
        %1000 = vmatpush1.msra.mxu0 %v941
        %1001 = vmatprep.subr.mxu0 0.0
        %1002 = vmatpush1.msra.mxu0 %v940
        %1003 = vmatprep.subr.mxu0 0.0
        %1004 = vmatpush2.msra.mxu0 0.0
        %1005 = vmatprep.subr.mxu0 0.0
        %1006 = vmatpush2.msra.mxu0 0.0
        %1007 = vmatprep.subr.mxu0 0.0
        %1008 = vmatpush2.msra.mxu0 0.0
        %1009 = vmatprep.subr.mxu0 0.0
        %1010 = vmatpush2.msra.mxu0 0.0
        %1011 = vmatprep.subr.mxu0 0.0
        %1012 = vmatpush2.msra.mxu0 0.0
        %1013 = vmatprep.subr.mxu0 0.0
        %1014 = vmatpush2.msra.mxu0 0.0
        %1015 = vmatprep.subr.mxu0 0.0
        %1016 = vmatpush2.msra.mxu0 0.0
        %1017 = vmatprep.subr.mxu0 0.0
        %1018 = vmatpush2.msra.mxu0 0.0
        %1019 = vmatprep.subr.mxu0 0.0
        %1020 = vmatpush2.msra.mxu0 0.0
        %1021 = vmatprep.subr.mxu0 0.0
        %1022 = vmatpush2.msra.mxu0 0.0
        %1023 = vmatprep.subr.mxu0 0.0
        %1024 = vmatpush2.msra.mxu0 0.0
        %1025 = vmatprep.subr.mxu0 0.0
        %1026 = vmatpush2.msra.mxu0 0.0
        %1027 = vmatprep.subr.mxu0 0.0
        %1028 = vmatpush2.msra.mxu0 0.0
        %1029 = vmatprep.subr.mxu0 0.0
        %1030 = vmatpush2.msra.mxu0 0.0
        %1031 = vmatprep.subr.mxu0 0.0
        %1032 = vmatpush2.msra.mxu0 0.0
        %1033 = vmatprep.subr.mxu0 0.0
        %1034 = vmatpush2.msra.mxu0 0.0
        %1035 = vmatprep.mubr.f32.mxu0 0.0
        %1036 = vmatmul.mubr.f32.gmra.mxu0 %v969
        %v1037 = vpop.f32.mrf.mxu0
        %v1038 = vadd.f32 %v966, %v1037
        %v1039 = vpop.f32.mrf.mxu0
        %1040 = vdwg.mxu0
        %vm1041 = vcmp.ge.f32.partialorder %v1038, 0.0
        %v1042 = vmul.f32 %v1038, 0.01
        %v1043 = vsel %vm1041, %v1038, %v1042
        %s1044 = scalar_lea.vmem %s267, 48 [#allocation2]
        %1045 = vst.msk [vmem:[%s1044] sm:$0xff] %vm408, %v1043
        %v1046 = vld [vmem:[%s942] sm:$0xff]
        %v1047 = vld [vmem:[%s942 + $0x8] sm:$0xff]
        %v1048 = vld [vmem:[%s299] sm:$0xff]
        %v1049 = vld [vmem:[%s299 + $0x8] sm:$0xff]
        %1052 = vrot.lane.b32.xlu0 %v1046, 127
        %v1053 = vpop.permute.xlu0 %1052
        %1054 = vrot.lane.b32.xlu0 %v1047, 127
        %v1055 = vpop.permute.xlu0 %1054
        %1060 = vrot.lane.b32.xlu0 %v1048, 127
        %v1061 = vpop.permute.xlu0 %1060
        %1062 = vrot.lane.b32.xlu0 %v1049, 127
        %v1063 = vpop.permute.xlu0 %1062
        %v1066 = vld [vmem:[%s2] sm:$0xff]
        %v1067 = vld [vmem:[%s3] sm:$0xff]
        %1069 = vset.pattern.permute.xlu0 0
        %1070 = vperm.xlu0 %1069, %v1067
        %v1071 = vpop.permute.xlu0 %1070
        %v1074 = vsel %vm331, %v1066, 0
        %1076 = vmatprep.subr.mxu0 0.0
        %1077 = vmatpush1.msra.mxu0 0.0
        %1078 = vmatprep.subr.mxu0 0.0
        %1079 = vmatpush1.msra.mxu0 0.0
        %1080 = vmatprep.subr.mxu0 0.0
        %1081 = vmatpush1.msra.mxu0 0.0
        %1082 = vmatprep.subr.mxu0 0.0
        %1083 = vmatpush1.msra.mxu0 0.0
        %1084 = vmatprep.subr.mxu0 0.0
        %1085 = vmatpush1.msra.mxu0 0.0
        %1086 = vmatprep.subr.mxu0 0.0
        %1087 = vmatpush1.msra.mxu0 0.0
        %1088 = vmatprep.subr.mxu0 0.0
        %1089 = vmatpush1.msra.mxu0 0.0
        %1090 = vmatprep.subr.mxu0 0.0
        %1091 = vmatpush1.msra.mxu0 0.0
        %1092 = vmatprep.subr.mxu0 0.0
        %1093 = vmatpush1.msra.mxu0 %v1063
        %1094 = vmatprep.subr.mxu0 0.0
        %1095 = vmatpush1.msra.mxu0 %v1061
        %1096 = vmatprep.subr.mxu0 0.0
        %1097 = vmatpush1.msra.mxu0 %v1049
        %1098 = vmatprep.subr.mxu0 0.0
        %1099 = vmatpush1.msra.mxu0 %v1048
        %1100 = vmatprep.subr.mxu0 0.0
        %1101 = vmatpush1.msra.mxu0 %v1055
        %1102 = vmatprep.subr.mxu0 0.0
        %1103 = vmatpush1.msra.mxu0 %v1053
        %1104 = vmatprep.subr.mxu0 0.0
        %1105 = vmatpush1.msra.mxu0 %v1047
        %1106 = vmatprep.subr.mxu0 0.0
        %1107 = vmatpush1.msra.mxu0 %v1046
        %1108 = vmatprep.subr.mxu0 0.0
        %1109 = vmatpush2.msra.mxu0 0.0
        %1110 = vmatprep.subr.mxu0 0.0
        %1111 = vmatpush2.msra.mxu0 0.0
        %1112 = vmatprep.subr.mxu0 0.0
        %1113 = vmatpush2.msra.mxu0 0.0
        %1114 = vmatprep.subr.mxu0 0.0
        %1115 = vmatpush2.msra.mxu0 0.0
        %1116 = vmatprep.subr.mxu0 0.0
        %1117 = vmatpush2.msra.mxu0 0.0
        %1118 = vmatprep.subr.mxu0 0.0
        %1119 = vmatpush2.msra.mxu0 0.0
        %1120 = vmatprep.subr.mxu0 0.0
        %1121 = vmatpush2.msra.mxu0 0.0
        %1122 = vmatprep.subr.mxu0 0.0
        %1123 = vmatpush2.msra.mxu0 0.0
        %1124 = vmatprep.subr.mxu0 0.0
        %1125 = vmatpush2.msra.mxu0 0.0
        %1126 = vmatprep.subr.mxu0 0.0
        %1127 = vmatpush2.msra.mxu0 0.0
        %1128 = vmatprep.subr.mxu0 0.0
        %1129 = vmatpush2.msra.mxu0 0.0
        %1130 = vmatprep.subr.mxu0 0.0
        %1131 = vmatpush2.msra.mxu0 0.0
        %1132 = vmatprep.subr.mxu0 0.0
        %1133 = vmatpush2.msra.mxu0 0.0
        %1134 = vmatprep.subr.mxu0 0.0
        %1135 = vmatpush2.msra.mxu0 0.0
        %1136 = vmatprep.subr.mxu0 0.0
        %1137 = vmatpush2.msra.mxu0 0.0
        %1138 = vmatprep.subr.mxu0 0.0
        %1139 = vmatpush2.msra.mxu0 0.0
        %1140 = vmatprep.mubr.f32.mxu0 0.0
        %1141 = vmatmul.mubr.f32.gmra.mxu0 %v1074
        %v1142 = vpop.f32.mrf.mxu0
        %v1143 = vadd.f32 %v1071, %v1142
        %v1144 = vpop.f32.mrf.mxu0
        %1145 = vdwg.mxu0
        %vm1146 = vcmp.ge.f32.partialorder %v1143, 0.0
        %v1147 = vmul.f32 %v1143, 0.01
        %v1148 = vsel %vm1146, %v1143, %v1147
        %s1149 = scalar_lea.vmem %s267, 56 [#allocation2]
        %1150 = vst.msk [vmem:[%s1149] sm:$0xff] %vm408, %v1148
        %s1151 = sand.u32 %s142, 1
        %s1152 = scalar_lea.sflag [#allocation3], %s1151
        %s1153 = sand.u32 %s142, 1
        %s1154 = smul.addr %s1153, 64
        %s1155 = scalar_lea.vmem [#allocation2], %s1154
        // Predicated region
        $region37: #{tpu_custom_call.1} parent=35 // pred_check
          %p1156 = pneg %p152
        $region38: #{tpu_custom_call.1} parent=35 // pred_check_branch
          %1158 = sbr.rel (%p1156) target = $region40
        $region39: #{tpu_custom_call.1} parent=35 // pred_region
          %s1159 = smul.u32 8, %s23
          %s1161 = ssub.s32 1024, 1024
          %1162 = vsyncadd %s1152, %s1161
          %s1163 = smul.addr %s22, 8
          %s1164 = sadd.s32 %s1159, %s1163
          %s1165 = smul.addr %s1164, 128
          %s1166 = scalar_lea.hbm %s4, %s1165
          %s1167 = sshll.u32 %s1155, 4
          %s1168 = int_to_ptr.vmem [resolvable:$true] %s1167
          %1173 = dma.vmem_to_hbm [thread:$0]  %s1168, 1024, %s1166, %s1152, 128, 128, 8
        $region40: #{tpu_custom_call.1} parent=35 // pred_fallthru
          _
      $region36: #{tpu_custom_call.1} parent=5 // pred_fallthru
        _
      %p1174 = scmp.le.s32.totalorder 2, %s13
      // Predicated region
      $region41: #{tpu_custom_call.1} parent=5 // pred_check
        %p1175 = pneg %p1174
      $region42: #{tpu_custom_call.1} parent=5 // pred_check_branch
        %1177 = sbr.rel (%p1175) target = $region44
      $region43: #{tpu_custom_call.1} parent=5 // pred_region
        %s1178 = ssub.s32 %s13, 2
        // Predicated region
        $region45: #{tpu_custom_call.1} parent=43 // pred_check
          %p1179 = pneg %p158
        $region46: #{tpu_custom_call.1} parent=43 // pred_check_branch
          %1181 = sbr.rel (%p1179) target = $region48
        $region47: #{tpu_custom_call.1} parent=43 // pred_region
          %s1182 = sand.u32 %s143, 1
          %s1183 = scalar_lea.sflag [#allocation3], %s1182
          %s1184 = sand.u32 %s143, 1
          %s1185 = smul.addr %s1184, 64
          %s1186 = scalar_lea.vmem [#allocation2], %s1185
          %1187 = dma.done %s1183, 1024
        $region48: #{tpu_custom_call.1} parent=43 // pred_fallthru
          _
      $region44: #{tpu_custom_call.1} parent=5 // pred_fallthru
        _
    $region6: #{tpu_custom_call.1} parent=1 // loop_footer
      %s17 = sadd.s32 1, %s13
    $region7: #{tpu_custom_call.1} parent=1 // loop_footer_branch
      %12 = sbr.rel target = $region3
    $region8: #{tpu_custom_call.1} parent=1 // loop_exit
      _
    %1188 = vsyncpa [#allocation3], 1
    %s1189 = scalar_lea.sflag [#allocation3], 1
    %1190 = vsyncpa %s1189, 1

</llo_original>
